<compile_context>
chip_gen: v7x
topology: tpu7x:2x2x1
jax: 0.10.0
libtpu: 0.0.40
codegen_flags: <defaults>
</compile_context>

<pallas_src>
import functools

import jax
import jax.numpy as jnp
from jax import lax
from jax.experimental import pallas as pl
from jax.experimental.pallas import tpu as pltpu

EPS = 1e-5  # nn.BatchNorm2d default eps


# ---------------------------------------------------------------------------
# In-kernel helpers
# ---------------------------------------------------------------------------
def _mish(v, *, approx=False):
    # mish(v) = v * tanh(softplus(v)) = v * u / (u + 2) with u = e^v (e^v + 2).
    # One exp (EUP) + one reciprocal (EUP) instead of exp + log1p + tanh.
    # Clamp the exponent: for v > 20 the ratio is exactly 1.0 in f32.
    e = jnp.exp(jnp.minimum(v, 20.0))
    u = e * (e + 2.0)
    return v * (u * pl.reciprocal(u + 2.0, approx=approx))


# ---------------------------------------------------------------------------
# Pass 1: conv1 (1x1) batch statistics, accumulated over the spatial grid axis
# ---------------------------------------------------------------------------
def _conv1_stats_kernel(x_ref, w1_ref, stat_ref):
    Hid = w1_ref.shape[0]
    y = jnp.dot(w1_ref[...], x_ref[0].astype(w1_ref.dtype),
                preferred_element_type=jnp.float32)           # (Hid, TP) f32
    s = jnp.sum(y, axis=1, keepdims=True)                     # (Hid, 1)
    q = jnp.sum(y * y, axis=1, keepdims=True)                 # (Hid, 1)

    @pl.when(pl.program_id(1) == 0)
    def _():
        stat_ref[0, pl.ds(0, Hid)] = s
        stat_ref[0, pl.ds(Hid, Hid)] = q

    @pl.when(pl.program_id(1) != 0)
    def _():
        stat_ref[0, pl.ds(0, Hid)] = stat_ref[0, pl.ds(0, Hid)] + s
        stat_ref[0, pl.ds(Hid, Hid)] = stat_ref[0, pl.ds(Hid, Hid)] + q


# ---------------------------------------------------------------------------
# Pass 2: ConvUnit1 (BN folded) + Mish + 3x3 conv via a 3-band stacked scratch
# ---------------------------------------------------------------------------
def _conv_block_kernel(x_ref, w1_ref, b1_ref, w2_ref,
                       z_ref, zstat_ref, stk_ref, *, W, approx):
    HW = x_ref.shape[2]
    C = x_ref.shape[1]
    Hid = w1_ref.shape[0]
    cd = stk_ref.dtype

    x = x_ref[0].astype(cd)                                   # (C, HW)
    # ConvUnit 1: BN1 scale already folded into w1, BN1 shift is b1.
    t = jnp.dot(w1_ref[...], x, preferred_element_type=jnp.float32) + b1_ref[...]
    t = _mish(t, approx=approx)                               # (Hid, HW) f32
    t_c = t.astype(cd)

    # Column-wrap masks for the dx = -1 / +1 bands (row wrap is handled by the
    # zeroed +-W pad columns of the scratch).
    ww = lax.broadcasted_iota(jnp.int32, (Hid, HW), 1) % W
    zero = jnp.zeros((), cd)
    t_m0 = jnp.where(ww < W - 1, t_c, zero)    # source for the dx = -1 band
    t_m2 = jnp.where(ww > 0, t_c, zero)        # source for the dx = +1 band

    # Shift-by-store into the (3*Hid, HW + 2W) stacked scratch: band kw holds,
    # at column W + q, the dx = (kw-1) shifted, wrap-masked t[:, q].
    # Full (Hid, HW) stores only -- no materialised value slices.
    stk_ref[pl.ds(0 * Hid, Hid), pl.ds(W + 1, HW)] = t_m0
    stk_ref[pl.ds(1 * Hid, Hid), pl.ds(W, HW)] = t_c
    stk_ref[pl.ds(2 * Hid, Hid), pl.ds(W - 1, HW)] = t_m2

    # Zero only the pad / never-valid edge columns (band interiors are fully
    # rewritten above; the right-pad zero also clears band-0's one-column
    # spill, so ordering after the stores matters).  ~3*Hid*(2W+1) elements
    # per image instead of a full 9*Hid*HW scratch fill.
    stk_ref[pl.ds(0, Hid), pl.ds(0, W + 1)] = jnp.zeros((Hid, W + 1), cd)
    stk_ref[pl.ds(Hid, 2 * Hid), pl.ds(0, W)] = jnp.zeros((2 * Hid, W), cd)
    stk_ref[pl.ds(0, 2 * Hid), pl.ds(W + HW, W)] = jnp.zeros((2 * Hid, W), cd)
    stk_ref[pl.ds(2 * Hid, Hid), pl.ds(W + HW - 1, W + 1)] = (
        jnp.zeros((Hid, W + 1), cd))

    # 3x3 conv as three accumulated K=3*Hid matmuls; the dy = -1/0/+1 taps are
    # plain column-offset reads of the same scratch at 0 / W / 2W.
    z = jnp.dot(w2_ref[0], stk_ref[:, pl.ds(0, HW)],
                preferred_element_type=jnp.float32)
    z = z + jnp.dot(w2_ref[1], stk_ref[:, pl.ds(W, HW)],
                    preferred_element_type=jnp.float32)
    z = z + jnp.dot(w2_ref[2], stk_ref[:, pl.ds(2 * W, HW)],
                    preferred_element_type=jnp.float32)

    z_ref[0] = z.astype(z_ref.dtype)
    zstat_ref[0, pl.ds(0, C)] = jnp.sum(z, axis=1, keepdims=True)      # sum
    zstat_ref[0, pl.ds(C, C)] = jnp.sum(z * z, axis=1, keepdims=True)  # sumsq


# ---------------------------------------------------------------------------
# Pass 3: BN2 + Mish + residual add
# ---------------------------------------------------------------------------
def _finalize_kernel(x_ref, z_ref, a2_ref, b2_ref, o_ref, *, approx):
    zn = a2_ref[...] * z_ref[0].astype(jnp.float32) + b2_ref[...]   # (C, TP)
    res = x_ref[0].astype(jnp.float32) + _mish(zn, approx=approx)
    o_ref[0] = res.astype(o_ref.dtype)


# ---------------------------------------------------------------------------
# Wrapper
# ---------------------------------------------------------------------------
def _hw_tile(hw: int, c: int, budget: int = 24 << 20) -> int:
    # Largest lane tile dividing H*W such that pass 3's three double-buffered
    # (C, tp) f32 streams stay well inside the scoped VMEM limit.
    for cand in (2048, 1024, 512, 256, 128):
        if hw % cand == 0 and 6 * c * cand * 4 <= budget:
            return cand
    return hw


@functools.partial(jax.jit, static_argnames=("compute_dtype",))
def resblock_pallas(x_nchw, conv1_w, gamma1, beta1, conv2_w, gamma2, beta2,
                    *, compute_dtype=jnp.float32):
    """x_nchw: (N,C,H,W). conv1_w: (Hid,C,1,1). conv2_w: (C,Hid,3,3)."""
    N, C, H, W = x_nchw.shape
    Hid = conv1_w.shape[0]
    HW = H * W
    P = N * HW
    approx = compute_dtype == jnp.bfloat16
    cd_bytes = jnp.dtype(compute_dtype).itemsize
    x_bytes = jnp.dtype(x_nchw.dtype).itemsize

    # Free reshapes / tiny weight relayouts only -- no activation transposes.
    x = x_nchw.reshape(N, C, HW)
    w1_f32 = conv1_w[:, :, 0, 0].astype(jnp.float32)                # (Hid, C)
    w1_p1 = w1_f32.astype(compute_dtype)
    # conv2 weights regrouped to (3, C, 3*Hid): [kh, c, kw*Hid + h], matching
    # the scratch band (kw) / hidden-channel (h) row order.
    w2b = jnp.transpose(conv2_w, (2, 3, 1, 0)).reshape(3, 3 * Hid, C)
    w2b = jnp.transpose(w2b, (0, 2, 1)).astype(compute_dtype)       # (3,C,3Hid)

    tp = _hw_tile(HW, C)
    n_t = HW // tp

    # ---- pass 1: conv1 batch statistics (reduction over the tile axis) ----
    stats1 = pl.pallas_call(
        _conv1_stats_kernel,
        grid=(N, n_t),
        in_specs=[
            pl.BlockSpec((1, C, tp), lambda n, t: (n, 0, t)),
            pl.BlockSpec((Hid, C), lambda n, t: (0, 0)),
        ],
        out_specs=pl.BlockSpec((1, 2 * Hid, 1), lambda n, t: (n, 0, 0)),
        out_shape=jax.ShapeDtypeStruct((N, 2 * Hid, 1), jnp.float32),
        compiler_params=pltpu.CompilerParams(
            dimension_semantics=("parallel", "arbitrary"),
            vmem_limit_bytes=32 * 1024 * 1024),
    )(x, w1_p1)

    mean1 = jnp.sum(stats1[:, :Hid, 0], axis=0) / P
    var1 = jnp.maximum(jnp.sum(stats1[:, Hid:, 0], axis=0) / P
                       - mean1 * mean1, 0.0)
    a1 = gamma1.astype(jnp.float32) * lax.rsqrt(var1 + EPS)
    b1 = beta1.astype(jnp.float32) - a1 * mean1
    w1f = (w1_f32 * a1[:, None]).astype(compute_dtype)  # BN1 scale folded in
    b1c = b1[:, None]                                   # (Hid, 1) f32

    # ---- pass 2: ConvUnit1 (folded) + 3x3 conv + conv2 batch statistics ----
    z_dtype = compute_dtype        # bf16 on the fast path halves HBM traffic
    z_bytes = jnp.dtype(z_dtype).itemsize
    padw = HW + 2 * W
    vmem2 = (2 * C * HW * x_bytes              # x block, double-buffered
             + 2 * C * HW * z_bytes            # z block, double-buffered
             + 3 * Hid * padw * cd_bytes       # stacked scratch
             + 2 * (10 * Hid * C + Hid) * 4    # weights / bias
             + 6 * Hid * HW * 4)               # in-kernel f32 temporaries
    vmem2 = int(min(max(vmem2 + (8 << 20), 32 << 20), 46 << 20))

    z, zstat = pl.pallas_call(
        functools.partial(_conv_block_kernel, W=W, approx=approx),
        grid=(N,),
        in_specs=[
            pl.BlockSpec((1, C, HW), lambda n: (n, 0, 0)),
            pl.BlockSpec((Hid, C), lambda n: (0, 0)),
            pl.BlockSpec((Hid, 1), lambda n: (0, 0)),
            pl.BlockSpec((3, C, 3 * Hid), lambda n: (0, 0, 0)),
        ],
        out_specs=(
            pl.BlockSpec((1, C, HW), lambda n: (n, 0, 0)),
            pl.BlockSpec((1, 2 * C, 1), lambda n: (n, 0, 0)),
        ),
        out_shape=(
            jax.ShapeDtypeStruct((N, C, HW), z_dtype),
            jax.ShapeDtypeStruct((N, 2 * C, 1), jnp.float32),
        ),
        scratch_shapes=[pltpu.VMEM((3 * Hid, padw), compute_dtype)],
        compiler_params=pltpu.CompilerParams(
            dimension_semantics=("parallel",),
            vmem_limit_bytes=vmem2),
        cost_estimate=pl.CostEstimate(
            flops=2 * P * Hid * C * 10,              # 1x1 (K=C) + 3x3 (K=9Hid)
            transcendentals=2 * P * Hid,             # exp + reciprocal (Mish)
            bytes_accessed=(P * C * x_bytes + P * C * z_bytes
                            + N * 2 * C * 4 + (10 * Hid * C + Hid) * 4)),
    )(x, w1f, b1c, w2b)

    mean2 = jnp.sum(zstat[:, :C, 0], axis=0) / P
    var2 = jnp.maximum(jnp.sum(zstat[:, C:, 0], axis=0) / P
                       - mean2 * mean2, 0.0)
    a2 = gamma2.astype(jnp.float32) * lax.rsqrt(var2 + EPS)
    b2 = beta2.astype(jnp.float32) - a2 * mean2

    # ---- pass 3: BN2 + Mish + residual (elementwise, lane-dense tiles) ----
    out = pl.pallas_call(
        functools.partial(_finalize_kernel, approx=approx),
        grid=(N, n_t),
        in_specs=[
            pl.BlockSpec((1, C, tp), lambda n, t: (n, 0, t)),
            pl.BlockSpec((1, C, tp), lambda n, t: (n, 0, t)),
            pl.BlockSpec((C, 1), lambda n, t: (0, 0)),
            pl.BlockSpec((C, 1), lambda n, t: (0, 0)),
        ],
        out_specs=pl.BlockSpec((1, C, tp), lambda n, t: (n, 0, t)),
        out_shape=jax.ShapeDtypeStruct((N, C, HW), x_nchw.dtype),
        compiler_params=pltpu.CompilerParams(
            dimension_semantics=("parallel", "parallel"),
            vmem_limit_bytes=32 * 1024 * 1024),
    )(x, z, a2[:, None], b2[:, None])

    return out.reshape(N, C, H, W)


# ---------------------------------------------------------------------------
# Pure-JAX reference (PyTorch training-mode semantics), NCHW end-to-end.
# ---------------------------------------------------------------------------
def resblock_ref(x, conv1_w, gamma1, beta1, conv2_w, gamma2, beta2):
    def mish(v):
        return v * jnp.tanh(jax.nn.softplus(v))

    def bn(y, g, b):
        mu = jnp.mean(y, axis=(0, 2, 3), keepdims=True)
        var = jnp.mean(jnp.square(y - mu), axis=(0, 2, 3), keepdims=True)
        return ((y - mu) * lax.rsqrt(var + EPS) * g.reshape(1, -1, 1, 1)
                + b.reshape(1, -1, 1, 1))

    dn = ("NCHW", "OIHW", "NCHW")
    y = lax.conv_general_dilated(x, conv1_w, (1, 1), ((0, 0), (0, 0)),
                                 dimension_numbers=dn)
    y = mish(bn(y, gamma1, beta1))
    z = lax.conv_general_dilated(y, conv2_w, (1, 1), ((1, 1), (1, 1)),
                                 dimension_numbers=dn)
    z = mish(bn(z, gamma2, beta2))
    return x + z


if __name__ == "__main__":
    N, C, H, W = 2, 4, 16, 16
    Hid = C  # hidden_channels defaults to channels in ResBlock.__init__

    key = jax.random.PRNGKey(0)
    ks = jax.random.split(key, 7)
    x = jax.random.normal(ks[0], (N, C, H, W), jnp.float32)
    conv1_w = 0.2 * jax.random.normal(ks[1], (Hid, C, 1, 1), jnp.float32)
    conv2_w = 0.2 * jax.random.normal(ks[2], (C, Hid, 3, 3), jnp.float32)
    gamma1 = 1.0 + 0.1 * jax.random.normal(ks[3], (Hid,), jnp.float32)
    beta1 = 0.1 * jax.random.normal(ks[4], (Hid,), jnp.float32)
    gamma2 = 1.0 + 0.1 * jax.random.normal(ks[5], (C,), jnp.float32)
    beta2 = 0.1 * jax.random.normal(ks[6], (C,), jnp.float32)

    ref = resblock_ref(x, conv1_w, gamma1, beta1, conv2_w, gamma2, beta2)

    # f32 path (correctness gate).
    out = jax.block_until_ready(
        resblock_pallas(x, conv1_w, gamma1, beta1, conv2_w, gamma2, beta2))
    assert out.shape == x.shape and out.dtype == x.dtype
    err = float(jnp.max(jnp.abs(out - ref)))
    assert jnp.allclose(out, ref, atol=2e-3, rtol=2e-3), f"f32 max_err={err}"

    # bf16-matmul fast path (same structure, MXU-native operands, bf16 z).
    out_bf = jax.block_until_ready(
        resblock_pallas(x, conv1_w, gamma1, beta1, conv2_w, gamma2, beta2,
                        compute_dtype=jnp.bfloat16))
    err_bf = float(jnp.max(jnp.abs(out_bf - ref)))
    assert jnp.allclose(out_bf, ref, atol=1e-1, rtol=1e-1), f"bf16 max_err={err_bf}"

    print("KERNEL_OK")
</pallas_src>

<mosaic_0001>
module attributes {stable_mosaic.version = 11 : i64} {
  func.func @_conv1_stats_kernel(%arg0: i32, %arg1: i32, %arg2: memref<1x4x256xf32, #tpu.memory_space<vmem>>, %arg3: memref<4x4xf32, #tpu.memory_space<vmem>>, %arg4: memref<1x8x1xf32, #tpu.memory_space<vmem>>) attributes {dimension_semantics = [#tpu.dimension_semantics<parallel>, #tpu.dimension_semantics<arbitrary>], iteration_bounds = array<i64: 2, 1>, scalar_prefetch = 0 : i64, scratch_operands = 0 : i64, tpu.core_type = #tpu.core_type<tc>, window_params = [{transform_indices = @transform_0, window_bounds = array<i64: 1, 4, 256>}, {pipeline_mode = #tpu.pipeline_mode<synchronous>, transform_indices = @transform_1, window_bounds = array<i64: 4, 4>}, {transform_indices = @transform_2, window_bounds = array<i64: 1, 8, 1>}]} {
    %c0 = arith.constant 0 : index
    %c0_0 = arith.constant 0 : index
    %0 = vector.load %arg3[%c0, %c0_0] : memref<4x4xf32, #tpu.memory_space<vmem>>, vector<4x4xf32>
    %c0_1 = arith.constant 0 : index
    %c0_2 = arith.constant 0 : index
    %c0_3 = arith.constant 0 : index
    %1 = vector.load %arg2[%c0_1, %c0_2, %c0_3] : memref<1x4x256xf32, #tpu.memory_space<vmem>>, vector<1x4x256xf32>
    %2 = vector.shape_cast %1 : vector<1x4x256xf32> to vector<4x256xf32>
    %cst = arith.constant dense<0.000000e+00> : vector<4x256xf32>
    %3 = tpu.matmul %0, %2, %cst {dimension_numbers = #tpu.dot_dimension_numbers<[1], [0], [0], [1], [0, 0, 1, 1], [], []>} : vector<4x4xf32>, vector<4x256xf32>, vector<4x256xf32> -> vector<4x256xf32>
    %cst_4 = arith.constant dense<0.000000e+00> : vector<4xf32>
    %4 = vector.multi_reduction <add>, %3, %cst_4 [1] : vector<4x256xf32> to vector<4xf32>
    %5 = vector.shape_cast %4 : vector<4xf32> to vector<4x1xf32>
    %6 = arith.mulf %3, %3 : vector<4x256xf32>
    %cst_5 = arith.constant dense<0.000000e+00> : vector<4xf32>
    %7 = vector.multi_reduction <add>, %6, %cst_5 [1] : vector<4x256xf32> to vector<4xf32>
    %8 = vector.shape_cast %7 : vector<4xf32> to vector<4x1xf32>
    %c0_i32 = arith.constant 0 : i32
    %9 = arith.cmpi eq, %arg1, %c0_i32 : i32
    %10 = arith.extui %9 : i1 to i32
    %c0_i32_6 = arith.constant 0 : i32
    %11 = arith.cmpi ne, %10, %c0_i32_6 : i32
    scf.if %11 {
      %c0_9 = arith.constant 0 : index
      %c0_10 = arith.constant 0 : index
      %c0_11 = arith.constant 0 : index
      %15 = vector.load %arg4[%c0_9, %c0_10, %c0_11] : memref<1x8x1xf32, #tpu.memory_space<vmem>>, vector<1x4x1xf32>
      %16 = vector.shape_cast %15 : vector<1x4x1xf32> to vector<4x1xf32>
      %17 = vector.shape_cast %5 : vector<4x1xf32> to vector<1x4x1xf32>
      tpu.vector_store %arg4[%c0_9, %c0_10, %c0_11], %17 {strides = array<i32>} : memref<1x8x1xf32, #tpu.memory_space<vmem>>, vector<1x4x1xf32>,
      %c0_12 = arith.constant 0 : index
      %c4 = arith.constant 4 : index
      %c0_13 = arith.constant 0 : index
      %18 = vector.load %arg4[%c0_12, %c4, %c0_13] : memref<1x8x1xf32, #tpu.memory_space<vmem>>, vector<1x4x1xf32>
      %19 = vector.shape_cast %18 : vector<1x4x1xf32> to vector<4x1xf32>
      %20 = vector.shape_cast %8 : vector<4x1xf32> to vector<1x4x1xf32>
      tpu.vector_store %arg4[%c0_12, %c4, %c0_13], %20 {strides = array<i32>} : memref<1x8x1xf32, #tpu.memory_space<vmem>>, vector<1x4x1xf32>,
    } else {
    }
    %c0_i32_7 = arith.constant 0 : i32
    %12 = arith.cmpi ne, %arg1, %c0_i32_7 : i32
    %13 = arith.extui %12 : i1 to i32
    %c0_i32_8 = arith.constant 0 : i32
    %14 = arith.cmpi ne, %13, %c0_i32_8 : i32
    scf.if %14 {
      %c0_9 = arith.constant 0 : index
      %c0_10 = arith.constant 0 : index
      %c0_11 = arith.constant 0 : index
      %15 = vector.load %arg4[%c0_9, %c0_10, %c0_11] : memref<1x8x1xf32, #tpu.memory_space<vmem>>, vector<1x4x1xf32>
      %16 = vector.shape_cast %15 : vector<1x4x1xf32> to vector<4x1xf32>
      %17 = arith.addf %16, %5 : vector<4x1xf32>
      %c0_12 = arith.constant 0 : index
      %c0_13 = arith.constant 0 : index
      %c0_14 = arith.constant 0 : index
      %18 = vector.load %arg4[%c0_12, %c0_13, %c0_14] : memref<1x8x1xf32, #tpu.memory_space<vmem>>, vector<1x4x1xf32>
      %19 = vector.shape_cast %18 : vector<1x4x1xf32> to vector<4x1xf32>
      %20 = vector.shape_cast %17 : vector<4x1xf32> to vector<1x4x1xf32>
      tpu.vector_store %arg4[%c0_12, %c0_13, %c0_14], %20 {strides = array<i32>} : memref<1x8x1xf32, #tpu.memory_space<vmem>>, vector<1x4x1xf32>,
      %c0_15 = arith.constant 0 : index
      %c4 = arith.constant 4 : index
      %c0_16 = arith.constant 0 : index
      %21 = vector.load %arg4[%c0_15, %c4, %c0_16] : memref<1x8x1xf32, #tpu.memory_space<vmem>>, vector<1x4x1xf32>
      %22 = vector.shape_cast %21 : vector<1x4x1xf32> to vector<4x1xf32>
      %23 = arith.addf %22, %8 : vector<4x1xf32>
      %c0_17 = arith.constant 0 : index
      %c4_18 = arith.constant 4 : index
      %c0_19 = arith.constant 0 : index
      %24 = vector.load %arg4[%c0_17, %c4_18, %c0_19] : memref<1x8x1xf32, #tpu.memory_space<vmem>>, vector<1x4x1xf32>
      %25 = vector.shape_cast %24 : vector<1x4x1xf32> to vector<4x1xf32>
      %26 = vector.shape_cast %23 : vector<4x1xf32> to vector<1x4x1xf32>
      tpu.vector_store %arg4[%c0_17, %c4_18, %c0_19], %26 {strides = array<i32>} : memref<1x8x1xf32, #tpu.memory_space<vmem>>, vector<1x4x1xf32>,
    } else {
    }
    return
  }
  func.func @transform_0(%arg0: i32, %arg1: i32) -> (i32, i32, i32) {
    %c0_i32 = arith.constant 0 : i32
    %c0_i32_0 = arith.constant 0 : i32
    return %arg0, %c0_i32, %arg1 : i32, i32, i32
  }
  func.func @transform_1(%arg0: i32, %arg1: i32) -> (i32, i32) {
    %c0_i32 = arith.constant 0 : i32
    %c0_i32_0 = arith.constant 0 : i32
    %c0_i32_1 = arith.constant 0 : i32
    return %c0_i32, %c0_i32_0 : i32, i32
  }
  func.func @transform_2(%arg0: i32, %arg1: i32) -> (i32, i32, i32) {
    %c0_i32 = arith.constant 0 : i32
    %c0_i32_0 = arith.constant 0 : i32
    %c0_i32_1 = arith.constant 0 : i32
    return %arg0, %c0_i32, %c0_i32_0 : i32, i32, i32
  }
}

module attributes {stable_mosaic.version = 11 : i64} {
  func.func @_finalize_kernel(%arg0: i32, %arg1: i32, %arg2: memref<1x4x256xf32, #tpu.memory_space<vmem>>, %arg3: memref<1x4x256xf32, #tpu.memory_space<vmem>>, %arg4: memref<4x1xf32, #tpu.memory_space<vmem>>, %arg5: memref<4x1xf32, #tpu.memory_space<vmem>>, %arg6: memref<1x4x256xf32, #tpu.memory_space<vmem>>) attributes {dimension_semantics = [#tpu.dimension_semantics<parallel>, #tpu.dimension_semantics<parallel>], iteration_bounds = array<i64: 2, 1>, scalar_prefetch = 0 : i64, scratch_operands = 0 : i64, tpu.core_type = #tpu.core_type<tc>, window_params = [{transform_indices = @transform_0, window_bounds = array<i64: 1, 4, 256>}, {transform_indices = @transform_1, window_bounds = array<i64: 1, 4, 256>}, {pipeline_mode = #tpu.pipeline_mode<synchronous>, transform_indices = @transform_2, window_bounds = array<i64: 4, 1>}, {pipeline_mode = #tpu.pipeline_mode<synchronous>, transform_indices = @transform_3, window_bounds = array<i64: 4, 1>}, {transform_indices = @transform_4, window_bounds = array<i64: 1, 4, 256>}]} {
    %c0 = arith.constant 0 : index
    %c0_0 = arith.constant 0 : index
    %0 = vector.load %arg4[%c0, %c0_0] : memref<4x1xf32, #tpu.memory_space<vmem>>, vector<4x1xf32>
    %c0_1 = arith.constant 0 : index
    %c0_2 = arith.constant 0 : index
    %c0_3 = arith.constant 0 : index
    %1 = vector.load %arg3[%c0_1, %c0_2, %c0_3] : memref<1x4x256xf32, #tpu.memory_space<vmem>>, vector<1x4x256xf32>
    %2 = vector.shape_cast %1 : vector<1x4x256xf32> to vector<4x256xf32>
    %3 = vector.broadcast %0 : vector<4x1xf32> to vector<4x256xf32>
    %4 = arith.mulf %3, %2 : vector<4x256xf32>
    %c0_4 = arith.constant 0 : index
    %c0_5 = arith.constant 0 : index
    %5 = vector.load %arg5[%c0_4, %c0_5] : memref<4x1xf32, #tpu.memory_space<vmem>>, vector<4x1xf32>
    %6 = vector.broadcast %5 : vector<4x1xf32> to vector<4x256xf32>
    %7 = arith.addf %4, %6 : vector<4x256xf32>
    %c0_6 = arith.constant 0 : index
    %c0_7 = arith.constant 0 : index
    %c0_8 = arith.constant 0 : index
    %8 = vector.load %arg2[%c0_6, %c0_7, %c0_8] : memref<1x4x256xf32, #tpu.memory_space<vmem>>, vector<1x4x256xf32>
    %9 = vector.shape_cast %8 : vector<1x4x256xf32> to vector<4x256xf32>
    %cst = arith.constant 2.000000e+01 : f32
    %10 = vector.broadcast %cst : f32 to vector<4x256xf32>
    %11 = arith.minimumf %7, %10 : vector<4x256xf32>
    %12 = math.exp %11 : vector<4x256xf32>
    %cst_9 = arith.constant 2.000000e+00 : f32
    %13 = vector.broadcast %cst_9 : f32 to vector<4x256xf32>
    %14 = arith.addf %12, %13 : vector<4x256xf32>
    %15 = arith.mulf %12, %14 : vector<4x256xf32>
    %cst_10 = arith.constant 2.000000e+00 : f32
    %16 = vector.broadcast %cst_10 : f32 to vector<4x256xf32>
    %17 = arith.addf %15, %16 : vector<4x256xf32>
    %18 = tpu.reciprocal %17 : vector<4x256xf32> -> vector<4x256xf32>
    %19 = arith.mulf %15, %18 : vector<4x256xf32>
    %20 = arith.mulf %7, %19 : vector<4x256xf32>
    %21 = arith.addf %9, %20 : vector<4x256xf32>
    %c0_11 = arith.constant 0 : index
    %c0_12 = arith.constant 0 : index
    %c0_13 = arith.constant 0 : index
    %22 = vector.load %arg6[%c0_11, %c0_12, %c0_13] : memref<1x4x256xf32, #tpu.memory_space<vmem>>, vector<1x4x256xf32>
    %23 = vector.shape_cast %22 : vector<1x4x256xf32> to vector<4x256xf32>
    %24 = vector.shape_cast %21 : vector<4x256xf32> to vector<1x4x256xf32>
    tpu.vector_store %arg6[%c0_11, %c0_12, %c0_13], %24 {strides = array<i32>} : memref<1x4x256xf32, #tpu.memory_space<vmem>>, vector<1x4x256xf32>,
    return
  }
  func.func @transform_0(%arg0: i32, %arg1: i32) -> (i32, i32, i32) {
    %c0_i32 = arith.constant 0 : i32
    %c0_i32_0 = arith.constant 0 : i32
    return %arg0, %c0_i32, %arg1 : i32, i32, i32
  }
  func.func @transform_1(%arg0: i32, %arg1: i32) -> (i32, i32, i32) {
    %c0_i32 = arith.constant 0 : i32
    %c0_i32_0 = arith.constant 0 : i32
    return %arg0, %c0_i32, %arg1 : i32, i32, i32
  }
  func.func @transform_2(%arg0: i32, %arg1: i32) -> (i32, i32) {
    %c0_i32 = arith.constant 0 : i32
    %c0_i32_0 = arith.constant 0 : i32
    %c0_i32_1 = arith.constant 0 : i32
    return %c0_i32, %c0_i32_0 : i32, i32
  }
  func.func @transform_3(%arg0: i32, %arg1: i32) -> (i32, i32) {
    %c0_i32 = arith.constant 0 : i32
    %c0_i32_0 = arith.constant 0 : i32
    %c0_i32_1 = arith.constant 0 : i32
    return %c0_i32, %c0_i32_0 : i32, i32
  }
  func.func @transform_4(%arg0: i32, %arg1: i32) -> (i32, i32, i32) {
    %c0_i32 = arith.constant 0 : i32
    %c0_i32_0 = arith.constant 0 : i32
    return %arg0, %c0_i32, %arg1 : i32, i32, i32
  }
}

module attributes {stable_mosaic.version = 11 : i64} {
  func.func @_conv_block_kernel(%arg0: i32, %arg1: memref<1x4x256xf32, #tpu.memory_space<vmem>>, %arg2: memref<4x4xf32, #tpu.memory_space<vmem>>, %arg3: memref<4x1xf32, #tpu.memory_space<vmem>>, %arg4: memref<3x4x12xf32, #tpu.memory_space<vmem>>, %arg5: memref<1x4x256xf32, #tpu.memory_space<vmem>>, %arg6: memref<1x8x1xf32, #tpu.memory_space<vmem>>, %arg7: memref<12x288xf32, #tpu.memory_space<vmem>>) attributes {dimension_semantics = [#tpu.dimension_semantics<parallel>], iteration_bounds = array<i64: 2>, scalar_prefetch = 0 : i64, scratch_operands = 1 : i64, tpu.core_type = #tpu.core_type<tc>, window_params = [{transform_indices = @transform_0, window_bounds = array<i64: 1, 4, 256>}, {pipeline_mode = #tpu.pipeline_mode<synchronous>, transform_indices = @transform_1, window_bounds = array<i64: 4, 4>}, {pipeline_mode = #tpu.pipeline_mode<synchronous>, transform_indices = @transform_2, window_bounds = array<i64: 4, 1>}, {pipeline_mode = #tpu.pipeline_mode<synchronous>, transform_indices = @transform_3, window_bounds = array<i64: 3, 4, 12>}, {transform_indices = @transform_4, window_bounds = array<i64: 1, 4, 256>}, {transform_indices = @transform_5, window_bounds = array<i64: 1, 8, 1>}]} {
    %c0 = arith.constant 0 : index
    %c0_0 = arith.constant 0 : index
    %c0_1 = arith.constant 0 : index
    %0 = vector.load %arg1[%c0, %c0_0, %c0_1] : memref<1x4x256xf32, #tpu.memory_space<vmem>>, vector<1x4x256xf32>
    %1 = vector.shape_cast %0 : vector<1x4x256xf32> to vector<4x256xf32>
    %c0_2 = arith.constant 0 : index
    %c0_3 = arith.constant 0 : index
    %2 = vector.load %arg2[%c0_2, %c0_3] : memref<4x4xf32, #tpu.memory_space<vmem>>, vector<4x4xf32>
    %cst = arith.constant dense<0.000000e+00> : vector<4x256xf32>
    %3 = tpu.matmul %2, %1, %cst {dimension_numbers = #tpu.dot_dimension_numbers<[1], [0], [0], [1], [0, 0, 1, 1], [], []>} : vector<4x4xf32>, vector<4x256xf32>, vector<4x256xf32> -> vector<4x256xf32>
    %c0_4 = arith.constant 0 : index
    %c0_5 = arith.constant 0 : index
    %4 = vector.load %arg3[%c0_4, %c0_5] : memref<4x1xf32, #tpu.memory_space<vmem>>, vector<4x1xf32>
    %5 = vector.broadcast %4 : vector<4x1xf32> to vector<4x256xf32>
    %6 = arith.addf %3, %5 : vector<4x256xf32>
    %cst_6 = arith.constant 2.000000e+01 : f32
    %7 = vector.broadcast %cst_6 : f32 to vector<4x256xf32>
    %8 = arith.minimumf %6, %7 : vector<4x256xf32>
    %9 = math.exp %8 : vector<4x256xf32>
    %cst_7 = arith.constant 2.000000e+00 : f32
    %10 = vector.broadcast %cst_7 : f32 to vector<4x256xf32>
    %11 = arith.addf %9, %10 : vector<4x256xf32>
    %12 = arith.mulf %9, %11 : vector<4x256xf32>
    %cst_8 = arith.constant 2.000000e+00 : f32
    %13 = vector.broadcast %cst_8 : f32 to vector<4x256xf32>
    %14 = arith.addf %12, %13 : vector<4x256xf32>
    %15 = tpu.reciprocal %14 : vector<4x256xf32> -> vector<4x256xf32>
    %16 = arith.mulf %12, %15 : vector<4x256xf32>
    %17 = arith.mulf %6, %16 : vector<4x256xf32>
    %18 = tpu.iota {dimensions = array<i32: 1>} : vector<4x256xi32>
    %c16_i32 = arith.constant 16 : i32
    %c0_i32 = arith.constant 0 : i32
    %19 = arith.cmpi eq, %c16_i32, %c0_i32 : i32
    %c1_i32 = arith.constant 1 : i32
    %20 = arith.select %19, %c1_i32, %c16_i32 : i32
    %21 = vector.broadcast %20 : i32 to vector<4x256xi32>
    %22 = arith.remsi %18, %21 : vector<4x256xi32>
    %c0_i32_9 = arith.constant 0 : i32
    %23 = vector.broadcast %c0_i32_9 : i32 to vector<4x256xi32>
    %24 = arith.cmpi ne, %22, %23 : vector<4x256xi32>
    %c0_i32_10 = arith.constant 0 : i32
    %25 = vector.broadcast %c0_i32_10 : i32 to vector<4x256xi32>
    %26 = arith.cmpi slt, %22, %25 : vector<4x256xi32>
    %c0_i32_11 = arith.constant 0 : i32
    %27 = arith.cmpi slt, %20, %c0_i32_11 : i32
    %28 = vector.broadcast %27 : i1 to vector<4x256xi1>
    %29 = vector.broadcast %28 : vector<4x256xi1> to vector<4x256xi1>
    %30 = arith.xori %26, %29 : vector<4x256xi1>
    %31 = arith.andi %30, %24 : vector<4x256xi1>
    %32 = vector.broadcast %20 : i32 to vector<4x256xi32>
    %33 = arith.addi %22, %32 : vector<4x256xi32>
    %34 = arith.select %31, %33, %22 : vector<4x256xi1>, vector<4x256xi32>
    %c15_i32 = arith.constant 15 : i32
    %35 = vector.broadcast %c15_i32 : i32 to vector<4x256xi32>
    %36 = arith.cmpi slt, %34, %35 : vector<4x256xi32>
    %cst_12 = arith.constant 0.000000e+00 : f32
    %37 = vector.broadcast %cst_12 : f32 to vector<4x256xf32>
    %38 = arith.select %36, %17, %37 : vector<4x256xi1>, vector<4x256xf32>
    %c0_i32_13 = arith.constant 0 : i32
    %39 = vector.broadcast %c0_i32_13 : i32 to vector<4x256xi32>
    %40 = arith.cmpi sgt, %34, %39 : vector<4x256xi32>
    %cst_14 = arith.constant 0.000000e+00 : f32
    %41 = vector.broadcast %cst_14 : f32 to vector<4x256xf32>
    %42 = arith.select %40, %17, %41 : vector<4x256xi1>, vector<4x256xf32>
    %c0_15 = arith.constant 0 : index
    %c17 = arith.constant 17 : index
    %43 = vector.load %arg7[%c0_15, %c17] : memref<12x288xf32, #tpu.memory_space<vmem>>, vector<4x256xf32>
    tpu.vector_store %arg7[%c0_15, %c17], %38 {strides = array<i32>} : memref<12x288xf32, #tpu.memory_space<vmem>>, vector<4x256xf32>,
    %c4 = arith.constant 4 : index
    %c16 = arith.constant 16 : index
    %44 = vector.load %arg7[%c4, %c16] : memref<12x288xf32, #tpu.memory_space<vmem>>, vector<4x256xf32>
    tpu.vector_store %arg7[%c4, %c16], %17 {strides = array<i32>} : memref<12x288xf32, #tpu.memory_space<vmem>>, vector<4x256xf32>,
    %c8 = arith.constant 8 : index
    %c15 = arith.constant 15 : index
    %45 = vector.load %arg7[%c8, %c15] : memref<12x288xf32, #tpu.memory_space<vmem>>, vector<4x256xf32>
    tpu.vector_store %arg7[%c8, %c15], %42 {strides = array<i32>} : memref<12x288xf32, #tpu.memory_space<vmem>>, vector<4x256xf32>,
    %cst_16 = arith.constant 0.000000e+00 : f32
    %46 = vector.broadcast %cst_16 : f32 to vector<4x17xf32>
    %c0_17 = arith.constant 0 : index
    %c0_18 = arith.constant 0 : index
    %47 = vector.load %arg7[%c0_17, %c0_18] : memref<12x288xf32, #tpu.memory_space<vmem>>, vector<4x17xf32>
    tpu.vector_store %arg7[%c0_17, %c0_18], %46 {strides = array<i32>} : memref<12x288xf32, #tpu.memory_space<vmem>>, vector<4x17xf32>,
    %cst_19 = arith.constant 0.000000e+00 : f32
    %48 = vector.broadcast %cst_19 : f32 to vector<8x16xf32>
    %c4_20 = arith.constant 4 : index
    %c0_21 = arith.constant 0 : index
    %49 = vector.load %arg7[%c4_20, %c0_21] : memref<12x288xf32, #tpu.memory_space<vmem>>, vector<8x16xf32>
    tpu.vector_store %arg7[%c4_20, %c0_21], %48 {strides = array<i32>} : memref<12x288xf32, #tpu.memory_space<vmem>>, vector<8x16xf32>,
    %cst_22 = arith.constant 0.000000e+00 : f32
    %50 = vector.broadcast %cst_22 : f32 to vector<8x16xf32>
    %c0_23 = arith.constant 0 : index
    %c272 = arith.constant 272 : index
    %51 = vector.load %arg7[%c0_23, %c272] : memref<12x288xf32, #tpu.memory_space<vmem>>, vector<8x16xf32>
    tpu.vector_store %arg7[%c0_23, %c272], %50 {strides = array<i32>} : memref<12x288xf32, #tpu.memory_space<vmem>>, vector<8x16xf32>,
    %cst_24 = arith.constant 0.000000e+00 : f32
    %52 = vector.broadcast %cst_24 : f32 to vector<4x17xf32>
    %c8_25 = arith.constant 8 : index
    %c271 = arith.constant 271 : index
    %53 = vector.load %arg7[%c8_25, %c271] : memref<12x288xf32, #tpu.memory_space<vmem>>, vector<4x17xf32>
    tpu.vector_store %arg7[%c8_25, %c271], %52 {strides = array<i32>} : memref<12x288xf32, #tpu.memory_space<vmem>>, vector<4x17xf32>,
    %c0_26 = arith.constant 0 : index
    %c0_27 = arith.constant 0 : index
    %c0_28 = arith.constant 0 : index
    %54 = vector.load %arg4[%c0_26, %c0_27, %c0_28] : memref<3x4x12xf32, #tpu.memory_space<vmem>>, vector<1x4x12xf32>
    %55 = vector.shape_cast %54 : vector<1x4x12xf32> to vector<4x12xf32>
    %c0_29 = arith.constant 0 : index
    %c0_30 = arith.constant 0 : index
    %56 = vector.load %arg7[%c0_29, %c0_30] : memref<12x288xf32, #tpu.memory_space<vmem>>, vector<12x256xf32>
    %cst_31 = arith.constant dense<0.000000e+00> : vector<4x256xf32>
    %57 = tpu.matmul %55, %56, %cst_31 {dimension_numbers = #tpu.dot_dimension_numbers<[1], [0], [0], [1], [0, 0, 1, 1], [], []>} : vector<4x12xf32>, vector<12x256xf32>, vector<4x256xf32> -> vector<4x256xf32>
    %c1 = arith.constant 1 : index
    %c0_32 = arith.constant 0 : index
    %c0_33 = arith.constant 0 : index
    %58 = vector.load %arg4[%c1, %c0_32, %c0_33] : memref<3x4x12xf32, #tpu.memory_space<vmem>>, vector<1x4x12xf32>
    %59 = vector.shape_cast %58 : vector<1x4x12xf32> to vector<4x12xf32>
    %c0_34 = arith.constant 0 : index
    %c16_35 = arith.constant 16 : index
    %60 = vector.load %arg7[%c0_34, %c16_35] : memref<12x288xf32, #tpu.memory_space<vmem>>, vector<12x256xf32>
    %cst_36 = arith.constant dense<0.000000e+00> : vector<4x256xf32>
    %61 = tpu.matmul %59, %60, %cst_36 {dimension_numbers = #tpu.dot_dimension_numbers<[1], [0], [0], [1], [0, 0, 1, 1], [], []>} : vector<4x12xf32>, vector<12x256xf32>, vector<4x256xf32> -> vector<4x256xf32>
    %62 = arith.addf %57, %61 : vector<4x256xf32>
    %c2 = arith.constant 2 : index
    %c0_37 = arith.constant 0 : index
    %c0_38 = arith.constant 0 : index
    %63 = vector.load %arg4[%c2, %c0_37, %c0_38] : memref<3x4x12xf32, #tpu.memory_space<vmem>>, vector<1x4x12xf32>
    %64 = vector.shape_cast %63 : vector<1x4x12xf32> to vector<4x12xf32>
    %c0_39 = arith.constant 0 : index
    %c32 = arith.constant 32 : index
    %65 = vector.load %arg7[%c0_39, %c32] : memref<12x288xf32, #tpu.memory_space<vmem>>, vector<12x256xf32>
    %cst_40 = arith.constant dense<0.000000e+00> : vector<4x256xf32>
    %66 = tpu.matmul %64, %65, %cst_40 {dimension_numbers = #tpu.dot_dimension_numbers<[1], [0], [0], [1], [0, 0, 1, 1], [], []>} : vector<4x12xf32>, vector<12x256xf32>, vector<4x256xf32> -> vector<4x256xf32>
    %67 = arith.addf %62, %66 : vector<4x256xf32>
    %c0_41 = arith.constant 0 : index
    %c0_42 = arith.constant 0 : index
    %c0_43 = arith.constant 0 : index
    %68 = vector.load %arg5[%c0_41, %c0_42, %c0_43] : memref<1x4x256xf32, #tpu.memory_space<vmem>>, vector<1x4x256xf32>
    %69 = vector.shape_cast %68 : vector<1x4x256xf32> to vector<4x256xf32>
    %70 = vector.shape_cast %67 : vector<4x256xf32> to vector<1x4x256xf32>
    tpu.vector_store %arg5[%c0_41, %c0_42, %c0_43], %70 {strides = array<i32>} : memref<1x4x256xf32, #tpu.memory_space<vmem>>, vector<1x4x256xf32>,
    %cst_44 = arith.constant dense<0.000000e+00> : vector<4xf32>
    %71 = vector.multi_reduction <add>, %67, %cst_44 [1] : vector<4x256xf32> to vector<4xf32>
    %72 = vector.shape_cast %71 : vector<4xf32> to vector<4x1xf32>
    %c0_45 = arith.constant 0 : index
    %c0_46 = arith.constant 0 : index
    %c0_47 = arith.constant 0 : index
    %73 = vector.load %arg6[%c0_45, %c0_46, %c0_47] : memref<1x8x1xf32, #tpu.memory_space<vmem>>, vector<1x4x1xf32>
    %74 = vector.shape_cast %73 : vector<1x4x1xf32> to vector<4x1xf32>
    %75 = vector.shape_cast %72 : vector<4x1xf32> to vector<1x4x1xf32>
    tpu.vector_store %arg6[%c0_45, %c0_46, %c0_47], %75 {strides = array<i32>} : memref<1x8x1xf32, #tpu.memory_space<vmem>>, vector<1x4x1xf32>,
    %76 = arith.mulf %67, %67 : vector<4x256xf32>
    %cst_48 = arith.constant dense<0.000000e+00> : vector<4xf32>
    %77 = vector.multi_reduction <add>, %76, %cst_48 [1] : vector<4x256xf32> to vector<4xf32>
    %78 = vector.shape_cast %77 : vector<4xf32> to vector<4x1xf32>
    %c0_49 = arith.constant 0 : index
    %c4_50 = arith.constant 4 : index
    %c0_51 = arith.constant 0 : index
    %79 = vector.load %arg6[%c0_49, %c4_50, %c0_51] : memref<1x8x1xf32, #tpu.memory_space<vmem>>, vector<1x4x1xf32>
    %80 = vector.shape_cast %79 : vector<1x4x1xf32> to vector<4x1xf32>
    %81 = vector.shape_cast %78 : vector<4x1xf32> to vector<1x4x1xf32>
    tpu.vector_store %arg6[%c0_49, %c4_50, %c0_51], %81 {strides = array<i32>} : memref<1x8x1xf32, #tpu.memory_space<vmem>>, vector<1x4x1xf32>,
    return
  }
  func.func @transform_0(%arg0: i32) -> (i32, i32, i32) {
    %c0_i32 = arith.constant 0 : i32
    %c0_i32_0 = arith.constant 0 : i32
    %c0_i32_1 = arith.constant 0 : i32
    return %arg0, %c0_i32, %c0_i32_0 : i32, i32, i32
  }
  func.func @transform_1(%arg0: i32) -> (i32, i32) {
    %c0_i32 = arith.constant 0 : i32
    %c0_i32_0 = arith.constant 0 : i32
    %c0_i32_1 = arith.constant 0 : i32
    return %c0_i32, %c0_i32_0 : i32, i32
  }
  func.func @transform_2(%arg0: i32) -> (i32, i32) {
    %c0_i32 = arith.constant 0 : i32
    %c0_i32_0 = arith.constant 0 : i32
    %c0_i32_1 = arith.constant 0 : i32
    return %c0_i32, %c0_i32_0 : i32, i32
  }
  func.func @transform_3(%arg0: i32) -> (i32, i32, i32) {
    %c0_i32 = arith.constant 0 : i32
    %c0_i32_0 = arith.constant 0 : i32
    %c0_i32_1 = arith.constant 0 : i32
    %c0_i32_2 = arith.constant 0 : i32
    return %c0_i32, %c0_i32_0, %c0_i32_1 : i32, i32, i32
  }
  func.func @transform_4(%arg0: i32) -> (i32, i32, i32) {
    %c0_i32 = arith.constant 0 : i32
    %c0_i32_0 = arith.constant 0 : i32
    %c0_i32_1 = arith.constant 0 : i32
    return %arg0, %c0_i32, %c0_i32_0 : i32, i32, i32
  }
  func.func @transform_5(%arg0: i32) -> (i32, i32, i32) {
    %c0_i32 = arith.constant 0 : i32
    %c0_i32_0 = arith.constant 0 : i32
    %c0_i32_1 = arith.constant 0 : i32
    return %arg0, %c0_i32, %c0_i32_0 : i32, i32, i32
  }
}

</mosaic_0001>

<llo_original>
// kernel: resblock_pallas.3
$region0: #{resblock_pallas.3}
  #allocation0 [shape = 'u32[]', space=smem, size = 0x4, offset = 0x4, fixed_abs, tag = 'smem constant byte address 0x4 - core index']
  #allocation1 [shape = 'u32[144,128]{1,0:T(1,128)}', space=vmem, size = 0x12000, scoped, tag = 'internal scratch']
  %s0 = inlined_call_operand.vmem [shape: f32[2,4,256], index: 0, kind: input, shape index: {}]
  %s1 = inlined_call_operand.vmem [shape: f32[4,4], index: 1, kind: input, shape index: {}]
  %s2 = inlined_call_operand.vmem [shape: f32[2,8,1], index: 2, kind: output, shape index: {}]
  %s3 = sld [smem:[#allocation0]]
  $region49: #{resblock_pallas.3} parent=0
    _
  %s5 = ssub.s32 1, %s3
  %s6 = scalar_select 0, %s5, %s3
  loop: start=0, step=1, limit=4
  $region2: #{resblock_pallas.3} parent=0 // loop_pre_header
    _
  $region3: #{resblock_pallas.3} parent=0 // loop_header
    %s8 = sphi 0, %s12
    %p9 = scmp.ge.s32.totalorder %s8, 4
    %s15 = sphi 0, %s27
    %s16 = sphi 0, %s23
    %s17 = sphi 0, %s15
    %s18 = sphi 0, %s16
    %s19 = sphi 0, %s17
    %s20 = sphi 0, %s18
    %s32 = sphi 0, %s34
    %s35 = sphi 0, %s32
    %s36 = sphi 0, %s35
    %s52 = sphi 0, %s36
    %s56 = sphi 0, %s56
    %s58 = sphi 0, %s56
    %s59 = sphi 0, %s58
    %s73 = sphi 0, %s59
    %s79 = sphi 0, %s81
    %s82 = sphi 0, %s79
    %s83 = sphi 0, %s82
    %s99 = sphi 0, %s83
  $region4: #{resblock_pallas.3} parent=0 // loop_header_branch
    %11 = sbr.rel (%p9) target = $region8
  $region5: #{resblock_pallas.3} parent=0 // loop_body
    %s13 = ssub.s32 %s8, 1
    %s14 = ssub.s32 %s8, 2
    %s21 = sadd.s32 1, %s16
    %p22 = scmp.ge.s32.totalorder %s21, 1
    %s23 = scalar_select %p22, 0, %s21
    %s24 = sadd.s32 1, %s15
    %s25 = scalar_select %p22, %s24, %s15
    %p26 = scmp.ge.s32.totalorder %s25, 2
    %s27 = scalar_select %p26, 0, %s25
    %s28 = ssub.s32 %s15, %s27
    %s29 = ssub.s32 %s16, %s23
    %s30 = sor.u32 %s28, %s29
    %p31 = scmp.eq.s32.totalorder %s30, 0
    %s33 = sadd.s32 %s32, 1
    %s34 = scalar_select %p31, %s32, %s33
    %p37 = pneg %p31
    %p38 = scmp.eq.s32.totalorder %s8, 1
    %p39 = por %p37, %p38
    %p40 = scmp.ne.s32.totalorder %s32, %s35
    %p41 = scmp.eq.s32.totalorder %s8, 0
    %p42 = por %p40, %p41
    %p43 = scmp.ne.s32.totalorder %s32, %s35
    %p44 = scmp.eq.s32.totalorder %s13, 1
    %p45 = por %p43, %p44
    %p46 = scmp.ne.s32.totalorder %s35, %s36
    %p47 = scmp.eq.s32.totalorder %s13, 0
    %p48 = por %p46, %p47
    %p49 = scmp.ne.s32.totalorder %s35, %s36
    %p50 = scmp.eq.s32.totalorder %s14, 1
    %p51 = por %p49, %p50
    %p53 = scmp.ne.s32.totalorder %s36, %s52
    %p54 = scmp.eq.s32.totalorder %s14, 0
    %p55 = por %p53, %p54
    %s57 = sadd.s32 %s56, 1
    %p60 = scmp.eq.s32.totalorder %s8, 1
    %p61 = scmp.ne.s32.totalorder %s56, %s58
    %p62 = scmp.eq.s32.totalorder %s8, 0
    %p63 = por %p61, %p62
    %p64 = scmp.ne.s32.totalorder %s56, %s58
    %p65 = scmp.eq.s32.totalorder %s13, 1
    %p66 = por %p64, %p65
    %p67 = scmp.ne.s32.totalorder %s58, %s59
    %p68 = scmp.eq.s32.totalorder %s13, 0
    %p69 = por %p67, %p68
    %p70 = scmp.ne.s32.totalorder %s58, %s59
    %p71 = scmp.eq.s32.totalorder %s14, 1
    %p72 = por %p70, %p71
    %p74 = scmp.ne.s32.totalorder %s59, %s73
    %p75 = scmp.eq.s32.totalorder %s14, 0
    %p76 = por %p74, %p75
    %s77 = ssub.s32 %s15, %s27
    %p78 = scmp.eq.s32.totalorder %s77, 0
    %s80 = sadd.s32 %s79, 1
    %s81 = scalar_select %p78, %s79, %s80
    %p84 = pneg %p78
    %p85 = scmp.eq.s32.totalorder %s8, 1
    %p86 = por %p84, %p85
    %p87 = scmp.ne.s32.totalorder %s79, %s82
    %p88 = scmp.eq.s32.totalorder %s8, 0
    %p89 = por %p87, %p88
    %p90 = scmp.ne.s32.totalorder %s79, %s82
    %p91 = scmp.eq.s32.totalorder %s13, 1
    %p92 = por %p90, %p91
    %p93 = scmp.ne.s32.totalorder %s82, %s83
    %p94 = scmp.eq.s32.totalorder %s13, 0
    %p95 = por %p93, %p94
    %p96 = scmp.ne.s32.totalorder %s82, %s83
    %p97 = scmp.eq.s32.totalorder %s14, 1
    %p98 = por %p96, %p97
    %p100 = scmp.ne.s32.totalorder %s83, %s99
    %p101 = scmp.eq.s32.totalorder %s14, 0
    %p102 = por %p100, %p101
    %p103 = scmp.le.s32.totalorder 1, %s8
    %p104 = scmp.lt.s32.totalorder %s8, 3
    %p105 = pnand %p103, %p104
    %p106 = pneg %p105
    // Predicated region
    $region9: #{resblock_pallas.3} parent=5 // pred_check
      _
    $region10: #{resblock_pallas.3} parent=5 // pred_check_branch
      %108 = sbr.rel (%p105) target = $region12
    $region11: #{resblock_pallas.3} parent=5 // pred_region
      %s109 = ssub.s32 %s8, 1
      // Predicated region
      $region13: #{resblock_pallas.3} parent=11 // pred_check
        %p110 = pneg %p69
      $region14: #{resblock_pallas.3} parent=11 // pred_check_branch
        %112 = sbr.rel (%p110) target = $region16
      $region15: #{resblock_pallas.3} parent=11 // pred_region
        _
      $region16: #{resblock_pallas.3} parent=11 // pred_fallthru
        _
    $region12: #{resblock_pallas.3} parent=5 // pred_fallthru
      _
    %p113 = scmp.lt.s32.totalorder %s8, 2
    // Predicated region
    $region17: #{resblock_pallas.3} parent=5 // pred_check
      %p114 = pneg %p113
    $region18: #{resblock_pallas.3} parent=5 // pred_check_branch
      %116 = sbr.rel (%p114) target = $region20
    $region19: #{resblock_pallas.3} parent=5 // pred_region
      // Predicated region
      $region21: #{resblock_pallas.3} parent=19 // pred_check
        %p117 = pneg %p42
      $region22: #{resblock_pallas.3} parent=19 // pred_check_branch
        %119 = sbr.rel (%p117) target = $region24
      $region23: #{resblock_pallas.3} parent=19 // pred_region
        %s120 = smul.u32 2, %s16
        %p121 = scmp.lt.s32.totalorder %s15, 1
        %s122 = scalar_select %p121, %s15, 1
        %p123 = scmp.lt.s32.totalorder %s120, 1
        %s124 = scalar_select %p123, %s120, 1
        %s125 = smul.addr %s122, 2
        %s126 = sadd.s32 %s124, %s125
        %s127 = smul.addr %s126, 4
        %s128 = scalar_lea.vmem %s0, %s127
        %s129 = smul.u32 2, %s16
      $region24: #{resblock_pallas.3} parent=19 // pred_fallthru
        _
    $region20: #{resblock_pallas.3} parent=5 // pred_fallthru
      _
    %p130 = scmp.le.s32.totalorder 1, %s8
    %p131 = scmp.lt.s32.totalorder %s8, 3
    %p132 = pnand %p130, %p131
    %p133 = pneg %p132
    // Predicated region
    $region25: #{resblock_pallas.3} parent=5 // pred_check
      _
    $region26: #{resblock_pallas.3} parent=5 // pred_check_branch
      %135 = sbr.rel (%p132) target = $region28
    $region27: #{resblock_pallas.3} parent=5 // pred_region
      %s136 = ssub.s32 %s8, 1
      %s137 = smul.u32 2, %s18
      %p138 = scmp.lt.s32.totalorder %s17, 1
      %s139 = scalar_select %p138, %s17, 1
      %p140 = scmp.lt.s32.totalorder %s137, 1
      %s141 = scalar_select %p140, %s137, 1
      %s142 = smul.addr %s139, 2
      %s143 = sadd.s32 %s141, %s142
      %s144 = smul.addr %s143, 4
      %s145 = scalar_lea.vmem %s0, %s144
      %p146 = pneg %p48
      %p147 = pneg %p45
      %p148 = pneg %p69
      %p149 = pneg %p66
      %p150 = pneg %p95
      %p151 = pneg %p92
      %p152 = scmp.lt.s32.totalorder %s17, 1
      %s153 = scalar_select %p152, %s17, 1
      %s154 = smul.addr %s153, 8
      %s155 = scalar_lea.vmem %s2, %s154
      %s156 = smul.u32 2, %s18
      %p157 = scmp.lt.s32.totalorder %s17, 1
      %s158 = scalar_select %p157, %s17, 1
      %p159 = scmp.lt.s32.totalorder %s156, 1
      %s160 = scalar_select %p159, %s156, 1
      %s161 = smul.addr %s158, 2
      %s162 = sadd.s32 %s160, %s161
      %s163 = smul.addr %s162, 4
      %s164 = scalar_lea.vmem %s0, %s163
      %s165 = smul.u32 2, %s18
      %p166 = scmp.lt.s32.totalorder %s17, 1
      %s167 = scalar_select %p166, %s17, 1
      %s168 = smul.addr %s167, 8
      %s169 = scalar_lea.vmem %s2, %s168
      %v170 = vld [vmem:[%s1] sm:$0xf]
      %v171 = vld [vmem:[%s164] sm:$0xff]
      %v173 = vcombine.high %v171, %v171
      %vm174 = vcmask 31744
      %v176 = vsel %vm174, %v170, 0
      %vm178 = vcmask 1043456
      %v179 = vsel %vm178, %v171, 0
      %v181 = vsel %vm178, %v173, 0
      %183 = vmatprep.subr.mxu0 %v181
      %184 = vmatpush1.msra.mxu0 %v179
      %185 = vmatprep.subr.mxu0 0.0
      %186 = vmatpush1.msra.mxu0 0.0
      %187 = vmatprep.subr.mxu0 0.0
      %188 = vmatpush1.msra.mxu0 0.0
      %189 = vmatprep.subr.mxu0 0.0
      %190 = vmatpush1.msra.mxu0 0.0
      %191 = vmatprep.subr.mxu0 0.0
      %192 = vmatpush1.msra.mxu0 0.0
      %193 = vmatprep.subr.mxu0 0.0
      %194 = vmatpush1.msra.mxu0 0.0
      %195 = vmatprep.subr.mxu0 0.0
      %196 = vmatpush1.msra.mxu0 0.0
      %197 = vmatprep.subr.mxu0 0.0
      %198 = vmatpush1.msra.mxu0 0.0
      %199 = vmatprep.subr.mxu0 0.0
      %200 = vmatpush1.msra.mxu0 0.0
      %201 = vmatprep.subr.mxu0 0.0
      %202 = vmatpush1.msra.mxu0 0.0
      %203 = vmatprep.subr.mxu0 0.0
      %204 = vmatpush1.msra.mxu0 0.0
      %205 = vmatprep.subr.mxu0 0.0
      %206 = vmatpush1.msra.mxu0 0.0
      %207 = vmatprep.subr.mxu0 0.0
      %208 = vmatpush1.msra.mxu0 0.0
      %209 = vmatprep.subr.mxu0 0.0
      %210 = vmatpush1.msra.mxu0 0.0
      %211 = vmatprep.subr.mxu0 0.0
      %212 = vmatpush1.msra.mxu0 0.0
      %213 = vmatprep.subr.mxu0 0.0
      %214 = vmatpush1.msra.mxu0 0.0
      %215 = vmatprep.subr.mxu0 0.0
      %216 = vmatpush1.msra.mxu0 0.0
      %217 = vmatprep.subr.mxu0 0.0
      %218 = vmatpush1.msra.mxu0 0.0
      %219 = vmatprep.subr.mxu0 0.0
      %220 = vmatpush1.msra.mxu0 0.0
      %221 = vmatprep.subr.mxu0 0.0
      %222 = vmatpush1.msra.mxu0 0.0
      %223 = vmatprep.subr.mxu0 0.0
      %224 = vmatpush1.msra.mxu0 0.0
      %225 = vmatprep.subr.mxu0 0.0
      %226 = vmatpush1.msra.mxu0 0.0
      %227 = vmatprep.subr.mxu0 0.0
      %228 = vmatpush1.msra.mxu0 0.0
      %229 = vmatprep.subr.mxu0 0.0
      %230 = vmatpush1.msra.mxu0 0.0
      %231 = vmatprep.subr.mxu0 0.0
      %232 = vmatpush1.msra.mxu0 0.0
      %233 = vmatprep.subr.mxu0 0.0
      %234 = vmatpush1.msra.mxu0 0.0
      %235 = vmatprep.subr.mxu0 0.0
      %236 = vmatpush1.msra.mxu0 0.0
      %237 = vmatprep.subr.mxu0 0.0
      %238 = vmatpush1.msra.mxu0 0.0
      %239 = vmatprep.subr.mxu0 0.0
      %240 = vmatpush1.msra.mxu0 0.0
      %241 = vmatprep.subr.mxu0 0.0
      %242 = vmatpush1.msra.mxu0 0.0
      %243 = vmatprep.subr.mxu0 0.0
      %244 = vmatpush1.msra.mxu0 0.0
      %245 = vmatprep.subr.mxu0 0.0
      %246 = vmatpush1.msra.mxu0 0.0
      %247 = vmatprep.mubr.f32.mxu0 0.0
      %248 = vmatmul.mubr.f32.gmra.mrb[0].mxu0 %v176
      %v249 = vpop.f32.mrb[0].mxu0
      %v250 = vadd.f32 0.0, %v249
      %v251 = vpop.f32.mrb[0].mxu0
      %v252 = vadd.f32 0.0, %v251
      %253 = vdwg.mxu0
      %v254 = vsel %vm178, %v250, 0.0
      %v255 = vsel %vm178, %v252, 0.0
      %v256 = vadd.f32 %v254, %v255
      %257 = vadd.xlane.f32.xlu0 %v256
      %v258 = vpop.xlane.xlu0 %257
      %v259 = vmul.f32 %v250, %v250
      %v260 = vmul.f32 %v252, %v252
      %v261 = vsel %vm178, %v259, 0.0
      %v262 = vsel %vm178, %v260, 0.0
      %v263 = vadd.f32 %v261, %v262
      %264 = vadd.xlane.f32.xlu0 %v263
      %v265 = vpop.xlane.xlu0 %264
      %p266 = scmp.eq.s32.totalorder %s18, 0
      // Predicated region
      $region29: #{resblock_pallas.3} parent=27 // pred_check
        %p267 = pneg %p266
      $region30: #{resblock_pallas.3} parent=27 // pred_check_branch
        %269 = sbr.rel (%p267) target = $region32
      $region31: #{resblock_pallas.3} parent=27 // pred_region
        %vm270 = vcmask 3072
        %271 = vst.msk [vmem:[%s169] sm:$0xf] %vm270, %v258
        %272 = vst.msk [vmem:[%s169 + $0x4] sm:$0xf] %vm270, %v265
      $region32: #{resblock_pallas.3} parent=27 // pred_fallthru
        _
      %p273 = scmp.ne.s32.totalorder %s18, 0
      // Predicated region
      $region33: #{resblock_pallas.3} parent=27 // pred_check
        %p274 = pneg %p273
      $region34: #{resblock_pallas.3} parent=27 // pred_check_branch
        %276 = sbr.rel (%p274) target = $region36
      $region35: #{resblock_pallas.3} parent=27 // pred_region
        %v277 = vld [vmem:[%s169] sm:$0xf]
        %v278 = vadd.f32 %v277, %v258
        %vm279 = vcmask 3072
        %280 = vst.msk [vmem:[%s169] sm:$0xf] %vm279, %v278
        %v281 = vld [vmem:[%s169 + $0x4] sm:$0xf]
        %v282 = vadd.f32 %v281, %v265
        %283 = vst.msk [vmem:[%s169 + $0x4] sm:$0xf] %vm279, %v282
      $region36: #{resblock_pallas.3} parent=27 // pred_fallthru
        _
      %p284 = scmp.lt.s32.totalorder %s17, 1
      %s285 = scalar_select %p284, %s17, 1
      %s286 = smul.addr %s285, 8
      %s287 = scalar_lea.vmem %s2, %s286
      // Predicated region
      $region37: #{resblock_pallas.3} parent=27 // pred_check
        %p288 = pneg %p92
      $region38: #{resblock_pallas.3} parent=27 // pred_check_branch
        %290 = sbr.rel (%p288) target = $region40
      $region39: #{resblock_pallas.3} parent=27 // pred_region
        _
      $region40: #{resblock_pallas.3} parent=27 // pred_fallthru
        _
    $region28: #{resblock_pallas.3} parent=5 // pred_fallthru
      _
    %p291 = scmp.le.s32.totalorder 2, %s8
    // Predicated region
    $region41: #{resblock_pallas.3} parent=5 // pred_check
      %p292 = pneg %p291
    $region42: #{resblock_pallas.3} parent=5 // pred_check_branch
      %294 = sbr.rel (%p292) target = $region44
    $region43: #{resblock_pallas.3} parent=5 // pred_region
      %s295 = ssub.s32 %s8, 2
      // Predicated region
      $region45: #{resblock_pallas.3} parent=43 // pred_check
        %p296 = pneg %p98
      $region46: #{resblock_pallas.3} parent=43 // pred_check_branch
        %298 = sbr.rel (%p296) target = $region48
      $region47: #{resblock_pallas.3} parent=43 // pred_region
        %p299 = scmp.lt.s32.totalorder %s19, 1
        %s300 = scalar_select %p299, %s19, 1
        %s301 = smul.addr %s300, 8
        %s302 = scalar_lea.vmem %s2, %s301
      $region48: #{resblock_pallas.3} parent=43 // pred_fallthru
        _
    $region44: #{resblock_pallas.3} parent=5 // pred_fallthru
      _
  $region6: #{resblock_pallas.3} parent=0 // loop_footer
    %s12 = sadd.s32 1, %s8
  $region7: #{resblock_pallas.3} parent=0 // loop_footer_branch
    %7 = sbr.rel target = $region3
  $region8: #{resblock_pallas.3} parent=0 // loop_exit
    _

// kernel: resblock_pallas.5
$region0: #{resblock_pallas.5}
  #allocation0 [shape = 'u32[]', space=smem, size = 0x4, offset = 0x4, fixed_abs, tag = 'smem constant byte address 0x4 - core index']
  #allocation1 [shape = 'u32[144,128]{1,0:T(1,128)}', space=vmem, size = 0x12000, scoped, tag = 'internal scratch']
  %s0 = inlined_call_operand.vmem [shape: f32[2,4,256], index: 0, kind: input, shape index: {}]
  %s1 = inlined_call_operand.vmem [shape: f32[2,4,256], index: 1, kind: input, shape index: {}]
  %s2 = inlined_call_operand.vmem [shape: f32[4,1], index: 2, kind: input, shape index: {}]
  %s3 = inlined_call_operand.vmem [shape: f32[4,1], index: 3, kind: input, shape index: {}]
  %s4 = inlined_call_operand.vmem [shape: f32[2,4,256], index: 4, kind: output, shape index: {}]
  %s5 = sld [smem:[#allocation0]]
  $region49: #{resblock_pallas.5} parent=0
    _
  %s7 = ssub.s32 1, %s5
  %s8 = scalar_select 0, %s7, %s5
  loop: start=0, step=1, limit=4
  $region2: #{resblock_pallas.5} parent=0 // loop_pre_header
    _
  $region3: #{resblock_pallas.5} parent=0 // loop_header
    %s10 = sphi 0, %s14
    %p11 = scmp.ge.s32.totalorder %s10, 4
    %s17 = sphi 0, %s29
    %s18 = sphi 0, %s25
    %s19 = sphi 0, %s17
    %s20 = sphi 0, %s18
    %s21 = sphi 0, %s19
    %s22 = sphi 0, %s20
    %s34 = sphi 0, %s36
    %s37 = sphi 0, %s34
    %s38 = sphi 0, %s37
    %s54 = sphi 0, %s38
    %s62 = sphi 0, %s64
    %s65 = sphi 0, %s62
    %s66 = sphi 0, %s65
    %s82 = sphi 0, %s66
    %s86 = sphi 0, %s86
    %s88 = sphi 0, %s86
    %s89 = sphi 0, %s88
    %s103 = sphi 0, %s89
    %s107 = sphi 0, %s107
    %s109 = sphi 0, %s107
    %s110 = sphi 0, %s109
    %s124 = sphi 0, %s110
    %s132 = sphi 0, %s134
    %s135 = sphi 0, %s132
    %s136 = sphi 0, %s135
    %s152 = sphi 0, %s136
  $region4: #{resblock_pallas.5} parent=0 // loop_header_branch
    %13 = sbr.rel (%p11) target = $region8
  $region5: #{resblock_pallas.5} parent=0 // loop_body
    %s15 = ssub.s32 %s10, 1
    %s16 = ssub.s32 %s10, 2
    %s23 = sadd.s32 1, %s18
    %p24 = scmp.ge.s32.totalorder %s23, 1
    %s25 = scalar_select %p24, 0, %s23
    %s26 = sadd.s32 1, %s17
    %s27 = scalar_select %p24, %s26, %s17
    %p28 = scmp.ge.s32.totalorder %s27, 2
    %s29 = scalar_select %p28, 0, %s27
    %s30 = ssub.s32 %s17, %s29
    %s31 = ssub.s32 %s18, %s25
    %s32 = sor.u32 %s30, %s31
    %p33 = scmp.eq.s32.totalorder %s32, 0
    %s35 = sadd.s32 %s34, 1
    %s36 = scalar_select %p33, %s34, %s35
    %p39 = pneg %p33
    %p40 = scmp.eq.s32.totalorder %s10, 1
    %p41 = por %p39, %p40
    %p42 = scmp.ne.s32.totalorder %s34, %s37
    %p43 = scmp.eq.s32.totalorder %s10, 0
    %p44 = por %p42, %p43
    %p45 = scmp.ne.s32.totalorder %s34, %s37
    %p46 = scmp.eq.s32.totalorder %s15, 1
    %p47 = por %p45, %p46
    %p48 = scmp.ne.s32.totalorder %s37, %s38
    %p49 = scmp.eq.s32.totalorder %s15, 0
    %p50 = por %p48, %p49
    %p51 = scmp.ne.s32.totalorder %s37, %s38
    %p52 = scmp.eq.s32.totalorder %s16, 1
    %p53 = por %p51, %p52
    %p55 = scmp.ne.s32.totalorder %s38, %s54
    %p56 = scmp.eq.s32.totalorder %s16, 0
    %p57 = por %p55, %p56
    %s58 = ssub.s32 %s17, %s29
    %s59 = ssub.s32 %s18, %s25
    %s60 = sor.u32 %s58, %s59
    %p61 = scmp.eq.s32.totalorder %s60, 0
    %s63 = sadd.s32 %s62, 1
    %s64 = scalar_select %p61, %s62, %s63
    %p67 = pneg %p61
    %p68 = scmp.eq.s32.totalorder %s10, 1
    %p69 = por %p67, %p68
    %p70 = scmp.ne.s32.totalorder %s62, %s65
    %p71 = scmp.eq.s32.totalorder %s10, 0
    %p72 = por %p70, %p71
    %p73 = scmp.ne.s32.totalorder %s62, %s65
    %p74 = scmp.eq.s32.totalorder %s15, 1
    %p75 = por %p73, %p74
    %p76 = scmp.ne.s32.totalorder %s65, %s66
    %p77 = scmp.eq.s32.totalorder %s15, 0
    %p78 = por %p76, %p77
    %p79 = scmp.ne.s32.totalorder %s65, %s66
    %p80 = scmp.eq.s32.totalorder %s16, 1
    %p81 = por %p79, %p80
    %p83 = scmp.ne.s32.totalorder %s66, %s82
    %p84 = scmp.eq.s32.totalorder %s16, 0
    %p85 = por %p83, %p84
    %s87 = sadd.s32 %s86, 1
    %p90 = scmp.eq.s32.totalorder %s10, 1
    %p91 = scmp.ne.s32.totalorder %s86, %s88
    %p92 = scmp.eq.s32.totalorder %s10, 0
    %p93 = por %p91, %p92
    %p94 = scmp.ne.s32.totalorder %s86, %s88
    %p95 = scmp.eq.s32.totalorder %s15, 1
    %p96 = por %p94, %p95
    %p97 = scmp.ne.s32.totalorder %s88, %s89
    %p98 = scmp.eq.s32.totalorder %s15, 0
    %p99 = por %p97, %p98
    %p100 = scmp.ne.s32.totalorder %s88, %s89
    %p101 = scmp.eq.s32.totalorder %s16, 1
    %p102 = por %p100, %p101
    %p104 = scmp.ne.s32.totalorder %s89, %s103
    %p105 = scmp.eq.s32.totalorder %s16, 0
    %p106 = por %p104, %p105
    %s108 = sadd.s32 %s107, 1
    %p111 = scmp.eq.s32.totalorder %s10, 1
    %p112 = scmp.ne.s32.totalorder %s107, %s109
    %p113 = scmp.eq.s32.totalorder %s10, 0
    %p114 = por %p112, %p113
    %p115 = scmp.ne.s32.totalorder %s107, %s109
    %p116 = scmp.eq.s32.totalorder %s15, 1
    %p117 = por %p115, %p116
    %p118 = scmp.ne.s32.totalorder %s109, %s110
    %p119 = scmp.eq.s32.totalorder %s15, 0
    %p120 = por %p118, %p119
    %p121 = scmp.ne.s32.totalorder %s109, %s110
    %p122 = scmp.eq.s32.totalorder %s16, 1
    %p123 = por %p121, %p122
    %p125 = scmp.ne.s32.totalorder %s110, %s124
    %p126 = scmp.eq.s32.totalorder %s16, 0
    %p127 = por %p125, %p126
    %s128 = ssub.s32 %s17, %s29
    %s129 = ssub.s32 %s18, %s25
    %s130 = sor.u32 %s128, %s129
    %p131 = scmp.eq.s32.totalorder %s130, 0
    %s133 = sadd.s32 %s132, 1
    %s134 = scalar_select %p131, %s132, %s133
    %p137 = pneg %p131
    %p138 = scmp.eq.s32.totalorder %s10, 1
    %p139 = por %p137, %p138
    %p140 = scmp.ne.s32.totalorder %s132, %s135
    %p141 = scmp.eq.s32.totalorder %s10, 0
    %p142 = por %p140, %p141
    %p143 = scmp.ne.s32.totalorder %s132, %s135
    %p144 = scmp.eq.s32.totalorder %s15, 1
    %p145 = por %p143, %p144
    %p146 = scmp.ne.s32.totalorder %s135, %s136
    %p147 = scmp.eq.s32.totalorder %s15, 0
    %p148 = por %p146, %p147
    %p149 = scmp.ne.s32.totalorder %s135, %s136
    %p150 = scmp.eq.s32.totalorder %s16, 1
    %p151 = por %p149, %p150
    %p153 = scmp.ne.s32.totalorder %s136, %s152
    %p154 = scmp.eq.s32.totalorder %s16, 0
    %p155 = por %p153, %p154
    %p156 = scmp.le.s32.totalorder 1, %s10
    %p157 = scmp.lt.s32.totalorder %s10, 3
    %p158 = pnand %p156, %p157
    %p159 = pneg %p158
    // Predicated region
    $region9: #{resblock_pallas.5} parent=5 // pred_check
      _
    $region10: #{resblock_pallas.5} parent=5 // pred_check_branch
      %161 = sbr.rel (%p158) target = $region12
    $region11: #{resblock_pallas.5} parent=5 // pred_region
      %s162 = ssub.s32 %s10, 1
      // Predicated region
      $region13: #{resblock_pallas.5} parent=11 // pred_check
        %p163 = pneg %p99
      $region14: #{resblock_pallas.5} parent=11 // pred_check_branch
        %165 = sbr.rel (%p163) target = $region16
      $region15: #{resblock_pallas.5} parent=11 // pred_region
        _
      $region16: #{resblock_pallas.5} parent=11 // pred_fallthru
        _
      // Predicated region
      $region17: #{resblock_pallas.5} parent=11 // pred_check
        %p166 = pneg %p120
      $region18: #{resblock_pallas.5} parent=11 // pred_check_branch
        %168 = sbr.rel (%p166) target = $region20
      $region19: #{resblock_pallas.5} parent=11 // pred_region
        _
      $region20: #{resblock_pallas.5} parent=11 // pred_fallthru
        _
    $region12: #{resblock_pallas.5} parent=5 // pred_fallthru
      _
    %p169 = scmp.lt.s32.totalorder %s10, 2
    // Predicated region
    $region21: #{resblock_pallas.5} parent=5 // pred_check
      %p170 = pneg %p169
    $region22: #{resblock_pallas.5} parent=5 // pred_check_branch
      %172 = sbr.rel (%p170) target = $region24
    $region23: #{resblock_pallas.5} parent=5 // pred_region
      // Predicated region
      $region25: #{resblock_pallas.5} parent=23 // pred_check
        %p173 = pneg %p44
      $region26: #{resblock_pallas.5} parent=23 // pred_check_branch
        %175 = sbr.rel (%p173) target = $region28
      $region27: #{resblock_pallas.5} parent=23 // pred_region
        %s176 = smul.u32 2, %s18
        %p177 = scmp.lt.s32.totalorder %s17, 1
        %s178 = scalar_select %p177, %s17, 1
        %p179 = scmp.lt.s32.totalorder %s176, 1
        %s180 = scalar_select %p179, %s176, 1
        %s181 = smul.addr %s178, 2
        %s182 = sadd.s32 %s180, %s181
        %s183 = smul.addr %s182, 4
        %s184 = scalar_lea.vmem %s0, %s183
        %s185 = smul.u32 2, %s18
      $region28: #{resblock_pallas.5} parent=23 // pred_fallthru
        _
      // Predicated region
      $region29: #{resblock_pallas.5} parent=23 // pred_check
        %p186 = pneg %p72
      $region30: #{resblock_pallas.5} parent=23 // pred_check_branch
        %188 = sbr.rel (%p186) target = $region32
      $region31: #{resblock_pallas.5} parent=23 // pred_region
        %s189 = smul.u32 2, %s18
        %p190 = scmp.lt.s32.totalorder %s17, 1
        %s191 = scalar_select %p190, %s17, 1
        %p192 = scmp.lt.s32.totalorder %s189, 1
        %s193 = scalar_select %p192, %s189, 1
        %s194 = smul.addr %s191, 2
        %s195 = sadd.s32 %s193, %s194
        %s196 = smul.addr %s195, 4
        %s197 = scalar_lea.vmem %s1, %s196
        %s198 = smul.u32 2, %s18
      $region32: #{resblock_pallas.5} parent=23 // pred_fallthru
        _
    $region24: #{resblock_pallas.5} parent=5 // pred_fallthru
      _
    %p199 = scmp.le.s32.totalorder 1, %s10
    %p200 = scmp.lt.s32.totalorder %s10, 3
    %p201 = pnand %p199, %p200
    %p202 = pneg %p201
    // Predicated region
    $region33: #{resblock_pallas.5} parent=5 // pred_check
      _
    $region34: #{resblock_pallas.5} parent=5 // pred_check_branch
      %204 = sbr.rel (%p201) target = $region36
    $region35: #{resblock_pallas.5} parent=5 // pred_region
      %s205 = ssub.s32 %s10, 1
      %s206 = smul.u32 2, %s20
      %p207 = scmp.lt.s32.totalorder %s19, 1
      %s208 = scalar_select %p207, %s19, 1
      %p209 = scmp.lt.s32.totalorder %s206, 1
      %s210 = scalar_select %p209, %s206, 1
      %s211 = smul.addr %s208, 2
      %s212 = sadd.s32 %s210, %s211
      %s213 = smul.addr %s212, 4
      %s214 = scalar_lea.vmem %s0, %s213
      %p215 = pneg %p50
      %p216 = pneg %p47
      %s217 = smul.u32 2, %s20
      %p218 = scmp.lt.s32.totalorder %s19, 1
      %s219 = scalar_select %p218, %s19, 1
      %p220 = scmp.lt.s32.totalorder %s217, 1
      %s221 = scalar_select %p220, %s217, 1
      %s222 = smul.addr %s219, 2
      %s223 = sadd.s32 %s221, %s222
      %s224 = smul.addr %s223, 4
      %s225 = scalar_lea.vmem %s1, %s224
      %p226 = pneg %p78
      %p227 = pneg %p75
      %p228 = pneg %p99
      %p229 = pneg %p96
      %p230 = pneg %p120
      %p231 = pneg %p117
      %p232 = pneg %p148
      %p233 = pneg %p145
      %s234 = smul.u32 2, %s20
      %p235 = scmp.lt.s32.totalorder %s19, 1
      %s236 = scalar_select %p235, %s19, 1
      %p237 = scmp.lt.s32.totalorder %s234, 1
      %s238 = scalar_select %p237, %s234, 1
      %s239 = smul.addr %s236, 2
      %s240 = sadd.s32 %s238, %s239
      %s241 = smul.addr %s240, 4
      %s242 = scalar_lea.vmem %s4, %s241
      %s243 = smul.u32 2, %s20
      %p244 = scmp.lt.s32.totalorder %s19, 1
      %s245 = scalar_select %p244, %s19, 1
      %p246 = scmp.lt.s32.totalorder %s243, 1
      %s247 = scalar_select %p246, %s243, 1
      %s248 = smul.addr %s245, 2
      %s249 = sadd.s32 %s247, %s248
      %s250 = smul.addr %s249, 4
      %s251 = scalar_lea.vmem %s0, %s250
      %s252 = smul.u32 2, %s20
      %s253 = smul.u32 2, %s20
      %p254 = scmp.lt.s32.totalorder %s19, 1
      %s255 = scalar_select %p254, %s19, 1
      %p256 = scmp.lt.s32.totalorder %s253, 1
      %s257 = scalar_select %p256, %s253, 1
      %s258 = smul.addr %s255, 2
      %s259 = sadd.s32 %s257, %s258
      %s260 = smul.addr %s259, 4
      %s261 = scalar_lea.vmem %s1, %s260
      %s262 = smul.u32 2, %s20
      %s263 = smul.u32 2, %s20
      %p264 = scmp.lt.s32.totalorder %s19, 1
      %s265 = scalar_select %p264, %s19, 1
      %p266 = scmp.lt.s32.totalorder %s263, 1
      %s267 = scalar_select %p266, %s263, 1
      %s268 = smul.addr %s265, 2
      %s269 = sadd.s32 %s267, %s268
      %s270 = smul.addr %s269, 4
      %s271 = scalar_lea.vmem %s4, %s270
      %s272 = smul.u32 2, %s20
      %v273 = vld [vmem:[%s2] sm:$0xf]
      %v274 = vld [vmem:[%s261] sm:$0xff]
      %276 = vset.pattern.permute.xlu0 0
      %277 = vperm.xlu0 %276, %v273
      %v278 = vpop.permute.xlu0 %277
      %v281 = vcombine.high %v274, %v274
      %v283 = vmul.f32 %v278, %v274
      %v284 = vmul.f32 %v278, %v281
      %v285 = vld [vmem:[%s3] sm:$0xf]
      %287 = vset.pattern.permute.xlu0 0
      %288 = vperm.xlu0 %287, %v285
      %v289 = vpop.permute.xlu0 %288
      %v291 = vadd.f32 %v283, %v289
      %v292 = vadd.f32 %v284, %v289
      %v293 = vld [vmem:[%s251] sm:$0xff]
      %v294 = vmin.f32 %v291, 20.0
      %v295 = vmin.f32 %v292, 20.0
      %v296 = vmul.f32 %v294, 1.442695
      %v297 = vpow.pop %v296
      %v298 = vmul.f32 %v295, 1.442695
      %v299 = vpow.pop %v298
      %v300 = vadd.f32 %v297, 2.0
      %v301 = vadd.f32 %v299, 2.0
      %v302 = vmul.f32 %v297, %v300
      %v303 = vmul.f32 %v299, %v301
      %v304 = vadd.f32 %v302, 2.0
      %v305 = vadd.f32 %v303, 2.0
      %v306 = vrcp.pop %v304
      %v307 = vrcp.pop %v305
      %v308 = vmul.f32 %v302, %v306
      %v309 = vmul.f32 %v303, %v307
      %v310 = vmul.f32 %v291, %v308
      %v311 = vmul.f32 %v292, %v309
      %v314 = vcombine.low %v310, %v311
      %v316 = vadd.f32 %v293, %v314
      %317 = vst [vmem:[%s271] sm:$0xff] %v316
      %s318 = smul.u32 2, %s20
      %p319 = scmp.lt.s32.totalorder %s19, 1
      %s320 = scalar_select %p319, %s19, 1
      %p321 = scmp.lt.s32.totalorder %s318, 1
      %s322 = scalar_select %p321, %s318, 1
      %s323 = smul.addr %s320, 2
      %s324 = sadd.s32 %s322, %s323
      %s325 = smul.addr %s324, 4
      %s326 = scalar_lea.vmem %s4, %s325
      // Predicated region
      $region37: #{resblock_pallas.5} parent=35 // pred_check
        %p327 = pneg %p145
      $region38: #{resblock_pallas.5} parent=35 // pred_check_branch
        %329 = sbr.rel (%p327) target = $region40
      $region39: #{resblock_pallas.5} parent=35 // pred_region
        %s330 = smul.u32 2, %s20
      $region40: #{resblock_pallas.5} parent=35 // pred_fallthru
        _
    $region36: #{resblock_pallas.5} parent=5 // pred_fallthru
      _
    %p331 = scmp.le.s32.totalorder 2, %s10
    // Predicated region
    $region41: #{resblock_pallas.5} parent=5 // pred_check
      %p332 = pneg %p331
    $region42: #{resblock_pallas.5} parent=5 // pred_check_branch
      %334 = sbr.rel (%p332) target = $region44
    $region43: #{resblock_pallas.5} parent=5 // pred_region
      %s335 = ssub.s32 %s10, 2
      // Predicated region
      $region45: #{resblock_pallas.5} parent=43 // pred_check
        %p336 = pneg %p151
      $region46: #{resblock_pallas.5} parent=43 // pred_check_branch
        %338 = sbr.rel (%p336) target = $region48
      $region47: #{resblock_pallas.5} parent=43 // pred_region
        %s339 = smul.u32 2, %s22
        %p340 = scmp.lt.s32.totalorder %s21, 1
        %s341 = scalar_select %p340, %s21, 1
        %p342 = scmp.lt.s32.totalorder %s339, 1
        %s343 = scalar_select %p342, %s339, 1
        %s344 = smul.addr %s341, 2
        %s345 = sadd.s32 %s343, %s344
        %s346 = smul.addr %s345, 4
        %s347 = scalar_lea.vmem %s4, %s346
      $region48: #{resblock_pallas.5} parent=43 // pred_fallthru
        _
    $region44: #{resblock_pallas.5} parent=5 // pred_fallthru
      _
  $region6: #{resblock_pallas.5} parent=0 // loop_footer
    %s14 = sadd.s32 1, %s10
  $region7: #{resblock_pallas.5} parent=0 // loop_footer_branch
    %9 = sbr.rel target = $region3
  $region8: #{resblock_pallas.5} parent=0 // loop_exit
    _

// kernel: resblock_pallas.4
$region0: #{resblock_pallas.4}
  #allocation0 [shape = 'u32[]', space=smem, size = 0x4, offset = 0x4, fixed_abs, tag = 'smem constant byte address 0x4 - core index']
  #allocation1 [shape = 'u32[144,128]{1,0:T(1,128)}', space=vmem, size = 0x12000, scoped, tag = 'internal scratch']
  #allocation2 [shape = 'f32[12,288]{1,0:T(8,128)}', space=vmem, size = 0x6000, scoped, tag = 'scratch operand']
  %s0 = inlined_call_operand.vmem [shape: f32[2,4,256], index: 0, kind: input, shape index: {}]
  %s1 = inlined_call_operand.vmem [shape: f32[4,4], index: 1, kind: input, shape index: {}]
  %s2 = inlined_call_operand.vmem [shape: f32[4,1], index: 2, kind: input, shape index: {}]
  %s3 = inlined_call_operand.vmem [shape: f32[3,4,12], index: 3, kind: input, shape index: {}]
  %s4 = inlined_call_operand.vmem [shape: f32[2,4,256], index: 4, kind: output, shape index: {0}]
  %s5 = inlined_call_operand.vmem [shape: f32[2,8,1], index: 5, kind: output, shape index: {1}]
  %6 = xla_tuple %s4, %s5
  %s7 = sld [smem:[#allocation0]]
  $region57: #{resblock_pallas.4} parent=0
    _
  %s9 = ssub.s32 1, %s7
  %s10 = scalar_select 0, %s9, %s7
  loop: start=0, step=1, limit=4
  $region2: #{resblock_pallas.4} parent=0 // loop_pre_header
    _
  $region3: #{resblock_pallas.4} parent=0 // loop_header
    %s12 = sphi 0, %s16
    %p13 = scmp.ge.s32.totalorder %s12, 4
    %s22 = sphi 0, %s24
    %s25 = sphi 0, %s22
    %s26 = sphi 0, %s25
    %s42 = sphi 0, %s26
    %s46 = sphi 0, %s46
    %s48 = sphi 0, %s46
    %s49 = sphi 0, %s48
    %s63 = sphi 0, %s49
    %s67 = sphi 0, %s67
    %s69 = sphi 0, %s67
    %s70 = sphi 0, %s69
    %s84 = sphi 0, %s70
    %s88 = sphi 0, %s88
    %s90 = sphi 0, %s88
    %s91 = sphi 0, %s90
    %s105 = sphi 0, %s91
    %s111 = sphi 0, %s113
    %s114 = sphi 0, %s111
    %s115 = sphi 0, %s114
    %s131 = sphi 0, %s115
    %s137 = sphi 0, %s139
    %s140 = sphi 0, %s137
    %s141 = sphi 0, %s140
    %s157 = sphi 0, %s141
  $region4: #{resblock_pallas.4} parent=0 // loop_header_branch
    %15 = sbr.rel (%p13) target = $region8
  $region5: #{resblock_pallas.4} parent=0 // loop_body
    %s17 = ssub.s32 %s12, 1
    %s18 = ssub.s32 %s12, 2
    %s19 = sadd.s32 %s12, 1
    %s20 = ssub.s32 %s12, %s19
    %p21 = scmp.eq.s32.totalorder %s20, 0
    %s23 = sadd.s32 %s22, 1
    %s24 = scalar_select %p21, %s22, %s23
    %p27 = pneg %p21
    %p28 = scmp.eq.s32.totalorder %s12, 1
    %p29 = por %p27, %p28
    %p30 = scmp.ne.s32.totalorder %s22, %s25
    %p31 = scmp.eq.s32.totalorder %s12, 0
    %p32 = por %p30, %p31
    %p33 = scmp.ne.s32.totalorder %s22, %s25
    %p34 = scmp.eq.s32.totalorder %s17, 1
    %p35 = por %p33, %p34
    %p36 = scmp.ne.s32.totalorder %s25, %s26
    %p37 = scmp.eq.s32.totalorder %s17, 0
    %p38 = por %p36, %p37
    %p39 = scmp.ne.s32.totalorder %s25, %s26
    %p40 = scmp.eq.s32.totalorder %s18, 1
    %p41 = por %p39, %p40
    %p43 = scmp.ne.s32.totalorder %s26, %s42
    %p44 = scmp.eq.s32.totalorder %s18, 0
    %p45 = por %p43, %p44
    %s47 = sadd.s32 %s46, 1
    %p50 = scmp.eq.s32.totalorder %s12, 1
    %p51 = scmp.ne.s32.totalorder %s46, %s48
    %p52 = scmp.eq.s32.totalorder %s12, 0
    %p53 = por %p51, %p52
    %p54 = scmp.ne.s32.totalorder %s46, %s48
    %p55 = scmp.eq.s32.totalorder %s17, 1
    %p56 = por %p54, %p55
    %p57 = scmp.ne.s32.totalorder %s48, %s49
    %p58 = scmp.eq.s32.totalorder %s17, 0
    %p59 = por %p57, %p58
    %p60 = scmp.ne.s32.totalorder %s48, %s49
    %p61 = scmp.eq.s32.totalorder %s18, 1
    %p62 = por %p60, %p61
    %p64 = scmp.ne.s32.totalorder %s49, %s63
    %p65 = scmp.eq.s32.totalorder %s18, 0
    %p66 = por %p64, %p65
    %s68 = sadd.s32 %s67, 1
    %p71 = scmp.eq.s32.totalorder %s12, 1
    %p72 = scmp.ne.s32.totalorder %s67, %s69
    %p73 = scmp.eq.s32.totalorder %s12, 0
    %p74 = por %p72, %p73
    %p75 = scmp.ne.s32.totalorder %s67, %s69
    %p76 = scmp.eq.s32.totalorder %s17, 1
    %p77 = por %p75, %p76
    %p78 = scmp.ne.s32.totalorder %s69, %s70
    %p79 = scmp.eq.s32.totalorder %s17, 0
    %p80 = por %p78, %p79
    %p81 = scmp.ne.s32.totalorder %s69, %s70
    %p82 = scmp.eq.s32.totalorder %s18, 1
    %p83 = por %p81, %p82
    %p85 = scmp.ne.s32.totalorder %s70, %s84
    %p86 = scmp.eq.s32.totalorder %s18, 0
    %p87 = por %p85, %p86
    %s89 = sadd.s32 %s88, 1
    %p92 = scmp.eq.s32.totalorder %s12, 1
    %p93 = scmp.ne.s32.totalorder %s88, %s90
    %p94 = scmp.eq.s32.totalorder %s12, 0
    %p95 = por %p93, %p94
    %p96 = scmp.ne.s32.totalorder %s88, %s90
    %p97 = scmp.eq.s32.totalorder %s17, 1
    %p98 = por %p96, %p97
    %p99 = scmp.ne.s32.totalorder %s90, %s91
    %p100 = scmp.eq.s32.totalorder %s17, 0
    %p101 = por %p99, %p100
    %p102 = scmp.ne.s32.totalorder %s90, %s91
    %p103 = scmp.eq.s32.totalorder %s18, 1
    %p104 = por %p102, %p103
    %p106 = scmp.ne.s32.totalorder %s91, %s105
    %p107 = scmp.eq.s32.totalorder %s18, 0
    %p108 = por %p106, %p107
    %s109 = ssub.s32 %s12, %s19
    %p110 = scmp.eq.s32.totalorder %s109, 0
    %s112 = sadd.s32 %s111, 1
    %s113 = scalar_select %p110, %s111, %s112
    %p116 = pneg %p110
    %p117 = scmp.eq.s32.totalorder %s12, 1
    %p118 = por %p116, %p117
    %p119 = scmp.ne.s32.totalorder %s111, %s114
    %p120 = scmp.eq.s32.totalorder %s12, 0
    %p121 = por %p119, %p120
    %p122 = scmp.ne.s32.totalorder %s111, %s114
    %p123 = scmp.eq.s32.totalorder %s17, 1
    %p124 = por %p122, %p123
    %p125 = scmp.ne.s32.totalorder %s114, %s115
    %p126 = scmp.eq.s32.totalorder %s17, 0
    %p127 = por %p125, %p126
    %p128 = scmp.ne.s32.totalorder %s114, %s115
    %p129 = scmp.eq.s32.totalorder %s18, 1
    %p130 = por %p128, %p129
    %p132 = scmp.ne.s32.totalorder %s115, %s131
    %p133 = scmp.eq.s32.totalorder %s18, 0
    %p134 = por %p132, %p133
    %s135 = ssub.s32 %s12, %s19
    %p136 = scmp.eq.s32.totalorder %s135, 0
    %s138 = sadd.s32 %s137, 1
    %s139 = scalar_select %p136, %s137, %s138
    %p142 = pneg %p136
    %p143 = scmp.eq.s32.totalorder %s12, 1
    %p144 = por %p142, %p143
    %p145 = scmp.ne.s32.totalorder %s137, %s140
    %p146 = scmp.eq.s32.totalorder %s12, 0
    %p147 = por %p145, %p146
    %p148 = scmp.ne.s32.totalorder %s137, %s140
    %p149 = scmp.eq.s32.totalorder %s17, 1
    %p150 = por %p148, %p149
    %p151 = scmp.ne.s32.totalorder %s140, %s141
    %p152 = scmp.eq.s32.totalorder %s17, 0
    %p153 = por %p151, %p152
    %p154 = scmp.ne.s32.totalorder %s140, %s141
    %p155 = scmp.eq.s32.totalorder %s18, 1
    %p156 = por %p154, %p155
    %p158 = scmp.ne.s32.totalorder %s141, %s157
    %p159 = scmp.eq.s32.totalorder %s18, 0
    %p160 = por %p158, %p159
    %p161 = scmp.le.s32.totalorder 1, %s12
    %p162 = scmp.lt.s32.totalorder %s12, 3
    %p163 = pnand %p161, %p162
    %p164 = pneg %p163
    // Predicated region
    $region9: #{resblock_pallas.4} parent=5 // pred_check
      _
    $region10: #{resblock_pallas.4} parent=5 // pred_check_branch
      %166 = sbr.rel (%p163) target = $region12
    $region11: #{resblock_pallas.4} parent=5 // pred_region
      %s167 = ssub.s32 %s12, 1
      // Predicated region
      $region13: #{resblock_pallas.4} parent=11 // pred_check
        %p168 = pneg %p59
      $region14: #{resblock_pallas.4} parent=11 // pred_check_branch
        %170 = sbr.rel (%p168) target = $region16
      $region15: #{resblock_pallas.4} parent=11 // pred_region
        _
      $region16: #{resblock_pallas.4} parent=11 // pred_fallthru
        _
      // Predicated region
      $region17: #{resblock_pallas.4} parent=11 // pred_check
        %p171 = pneg %p80
      $region18: #{resblock_pallas.4} parent=11 // pred_check_branch
        %173 = sbr.rel (%p171) target = $region20
      $region19: #{resblock_pallas.4} parent=11 // pred_region
        _
      $region20: #{resblock_pallas.4} parent=11 // pred_fallthru
        _
      // Predicated region
      $region21: #{resblock_pallas.4} parent=11 // pred_check
        %p174 = pneg %p101
      $region22: #{resblock_pallas.4} parent=11 // pred_check_branch
        %176 = sbr.rel (%p174) target = $region24
      $region23: #{resblock_pallas.4} parent=11 // pred_region
        _
      $region24: #{resblock_pallas.4} parent=11 // pred_fallthru
        _
    $region12: #{resblock_pallas.4} parent=5 // pred_fallthru
      _
    %p177 = scmp.lt.s32.totalorder %s12, 2
    // Predicated region
    $region25: #{resblock_pallas.4} parent=5 // pred_check
      %p178 = pneg %p177
    $region26: #{resblock_pallas.4} parent=5 // pred_check_branch
      %180 = sbr.rel (%p178) target = $region28
    $region27: #{resblock_pallas.4} parent=5 // pred_region
      // Predicated region
      $region29: #{resblock_pallas.4} parent=27 // pred_check
        %p181 = pneg %p32
      $region30: #{resblock_pallas.4} parent=27 // pred_check_branch
        %183 = sbr.rel (%p181) target = $region32
      $region31: #{resblock_pallas.4} parent=27 // pred_region
        %p184 = scmp.lt.s32.totalorder %s12, 1
        %s185 = scalar_select %p184, %s12, 1
        %s186 = smul.addr %s185, 2
        %s187 = smul.addr %s186, 4
        %s188 = scalar_lea.vmem %s0, %s187
      $region32: #{resblock_pallas.4} parent=27 // pred_fallthru
        _
    $region28: #{resblock_pallas.4} parent=5 // pred_fallthru
      _
    %p189 = scmp.le.s32.totalorder 1, %s12
    %p190 = scmp.lt.s32.totalorder %s12, 3
    %p191 = pnand %p189, %p190
    %p192 = pneg %p191
    // Predicated region
    $region33: #{resblock_pallas.4} parent=5 // pred_check
      _
    $region34: #{resblock_pallas.4} parent=5 // pred_check_branch
      %194 = sbr.rel (%p191) target = $region36
    $region35: #{resblock_pallas.4} parent=5 // pred_region
      %s195 = ssub.s32 %s12, 1
      %p196 = scmp.lt.s32.totalorder %s17, 1
      %s197 = scalar_select %p196, %s17, 1
      %s198 = smul.addr %s197, 2
      %s199 = smul.addr %s198, 4
      %s200 = scalar_lea.vmem %s0, %s199
      %p201 = pneg %p38
      %p202 = pneg %p35
      %p203 = pneg %p59
      %p204 = pneg %p56
      %p205 = pneg %p80
      %p206 = pneg %p77
      %p207 = pneg %p101
      %p208 = pneg %p98
      %p209 = pneg %p127
      %p210 = pneg %p124
      %p211 = scmp.lt.s32.totalorder %s17, 1
      %s212 = scalar_select %p211, %s17, 1
      %s213 = smul.addr %s212, 2
      %s214 = smul.addr %s213, 4
      %s215 = scalar_lea.vmem %s4, %s214
      %p216 = pneg %p153
      %p217 = pneg %p150
      %p218 = scmp.lt.s32.totalorder %s17, 1
      %s219 = scalar_select %p218, %s17, 1
      %s220 = smul.addr %s219, 8
      %s221 = scalar_lea.vmem %s5, %s220
      %p222 = scmp.lt.s32.totalorder %s17, 1
      %s223 = scalar_select %p222, %s17, 1
      %s224 = smul.addr %s223, 2
      %s225 = smul.addr %s224, 4
      %s226 = scalar_lea.vmem %s0, %s225
      %p227 = scmp.lt.s32.totalorder %s17, 1
      %s228 = scalar_select %p227, %s17, 1
      %s229 = smul.addr %s228, 2
      %s230 = smul.addr %s229, 4
      %s231 = scalar_lea.vmem %s4, %s230
      %p232 = scmp.lt.s32.totalorder %s17, 1
      %s233 = scalar_select %p232, %s17, 1
      %s234 = smul.addr %s233, 8
      %s235 = scalar_lea.vmem %s5, %s234
      %v236 = vld [vmem:[%s226] sm:$0xff]
      %v237 = vld [vmem:[%s1] sm:$0xf]
      %v238 = vld [vmem:[%s2] sm:$0xf]
      %240 = vset.pattern.permute.xlu0 0
      %241 = vperm.xlu0 %240, %v238
      %v242 = vpop.permute.xlu0 %241
      %v245 = vcombine.high %v236, %v236
      %vm246 = vcmask 31744
      %v248 = vsel %vm246, %v237, 0
      %vm250 = vcmask 1043456
      %v251 = vsel %vm250, %v236, 0
      %v253 = vsel %vm250, %v245, 0
      %255 = vmatprep.subr.mxu0 %v253
      %256 = vmatpush1.msra.mxu0 %v251
      %257 = vmatprep.subr.mxu0 0.0
      %258 = vmatpush1.msra.mxu0 0.0
      %259 = vmatprep.subr.mxu0 0.0
      %260 = vmatpush1.msra.mxu0 0.0
      %261 = vmatprep.subr.mxu0 0.0
      %262 = vmatpush1.msra.mxu0 0.0
      %263 = vmatprep.subr.mxu0 0.0
      %264 = vmatpush1.msra.mxu0 0.0
      %265 = vmatprep.subr.mxu0 0.0
      %266 = vmatpush1.msra.mxu0 0.0
      %267 = vmatprep.subr.mxu0 0.0
      %268 = vmatpush1.msra.mxu0 0.0
      %269 = vmatprep.subr.mxu0 0.0
      %270 = vmatpush1.msra.mxu0 0.0
      %271 = vmatprep.subr.mxu0 0.0
      %272 = vmatpush1.msra.mxu0 0.0
      %273 = vmatprep.subr.mxu0 0.0
      %274 = vmatpush1.msra.mxu0 0.0
      %275 = vmatprep.subr.mxu0 0.0
      %276 = vmatpush1.msra.mxu0 0.0
      %277 = vmatprep.subr.mxu0 0.0
      %278 = vmatpush1.msra.mxu0 0.0
      %279 = vmatprep.subr.mxu0 0.0
      %280 = vmatpush1.msra.mxu0 0.0
      %281 = vmatprep.subr.mxu0 0.0
      %282 = vmatpush1.msra.mxu0 0.0
      %283 = vmatprep.subr.mxu0 0.0
      %284 = vmatpush1.msra.mxu0 0.0
      %285 = vmatprep.subr.mxu0 0.0
      %286 = vmatpush1.msra.mxu0 0.0
      %287 = vmatprep.subr.mxu0 0.0
      %288 = vmatpush1.msra.mxu0 0.0
      %289 = vmatprep.subr.mxu0 0.0
      %290 = vmatpush1.msra.mxu0 0.0
      %291 = vmatprep.subr.mxu0 0.0
      %292 = vmatpush1.msra.mxu0 0.0
      %293 = vmatprep.subr.mxu0 0.0
      %294 = vmatpush1.msra.mxu0 0.0
      %295 = vmatprep.subr.mxu0 0.0
      %296 = vmatpush1.msra.mxu0 0.0
      %297 = vmatprep.subr.mxu0 0.0
      %298 = vmatpush1.msra.mxu0 0.0
      %299 = vmatprep.subr.mxu0 0.0
      %300 = vmatpush1.msra.mxu0 0.0
      %301 = vmatprep.subr.mxu0 0.0
      %302 = vmatpush1.msra.mxu0 0.0
      %303 = vmatprep.subr.mxu0 0.0
      %304 = vmatpush1.msra.mxu0 0.0
      %305 = vmatprep.subr.mxu0 0.0
      %306 = vmatpush1.msra.mxu0 0.0
      %307 = vmatprep.subr.mxu0 0.0
      %308 = vmatpush1.msra.mxu0 0.0
      %309 = vmatprep.subr.mxu0 0.0
      %310 = vmatpush1.msra.mxu0 0.0
      %311 = vmatprep.subr.mxu0 0.0
      %312 = vmatpush1.msra.mxu0 0.0
      %313 = vmatprep.subr.mxu0 0.0
      %314 = vmatpush1.msra.mxu0 0.0
      %315 = vmatprep.subr.mxu0 0.0
      %316 = vmatpush1.msra.mxu0 0.0
      %317 = vmatprep.subr.mxu0 0.0
      %318 = vmatpush1.msra.mxu0 0.0
      %319 = vmatprep.mubr.f32.mxu0 0.0
      %320 = vmatmul.mubr.f32.gmra.mrb[0].mxu0 %v248
      %v321 = vpop.f32.mrb[0].mxu0
      %v322 = vadd.f32 %v242, %v321
      %v323 = vpop.f32.mrb[0].mxu0
      %v324 = vadd.f32 %v242, %v323
      %325 = vdwg.mxu0
      %v326 = vmin.f32 %v322, 20.0
      %v327 = vmin.f32 %v324, 20.0
      %v328 = vmul.f32 %v326, 1.442695
      %v329 = vpow.pop %v328
      %v330 = vmul.f32 %v327, 1.442695
      %v331 = vpow.pop %v330
      %v332 = vadd.f32 %v329, 2.0
      %v333 = vadd.f32 %v331, 2.0
      %v334 = vmul.f32 %v329, %v332
      %v335 = vmul.f32 %v331, %v333
      %v336 = vadd.f32 %v334, 2.0
      %v337 = vadd.f32 %v335, 2.0
      %v338 = vrcp.pop %v336
      %v339 = vrcp.pop %v337
      %v340 = vmul.f32 %v334, %v338
      %v341 = vmul.f32 %v335, %v339
      %v342 = vmul.f32 %v322, %v340
      %v343 = vmul.f32 %v324, %v341
      %v344 = vlaneseq
      %v345 = vand.u32 %v344, 127
      %v346 = vadd.s32 %v345, 128
      %vm347 = vcmp.lt.s32.totalorder %v345, 0
      %v348 = vsub.s32 0, %v345
      %v349 = vsel %vm347, %v348, %v345
      %v350 = vshrl.u32 %v349, 4
      %v351 = vand.u32 %v349, 15
      %v352 = vsub.s32 0, %v351
      %v353 = vsel %vm347, %v352, %v351
      %vm354 = vcmp.lt.s32.totalorder %v346, 0
      %v355 = vsub.s32 0, %v346
      %v356 = vsel %vm354, %v355, %v346
      %v357 = vshrl.u32 %v356, 4
      %v358 = vand.u32 %v356, 15
      %v359 = vsub.s32 0, %v358
      %v360 = vsel %vm354, %v359, %v358
      %vm361 = vcmp.ne.s32.totalorder %v353, 0
      %vm362 = vcmp.ne.s32.totalorder %v360, 0
      %vm363 = vcmp.lt.s32.totalorder %v353, 0
      %vm364 = vcmp.lt.s32.totalorder %v360, 0
      %vm365 = vmand %vm363, %vm361
      %vm366 = vmand %vm364, %vm362
      %v367 = vadd.s32 %v353, 16
      %v368 = vadd.s32 %v360, 16
      %v369 = vsel %vm365, %v367, %v353
      %v370 = vsel %vm366, %v368, %v360
      %vm371 = vcmp.lt.s32.totalorder %v369, 15
      %vm372 = vcmp.lt.s32.totalorder %v370, 15
      %v373 = vsel %vm371, %v342, 0.0
      %v374 = vsel %vm372, %v343, 0.0
      %vm375 = vcmp.gt.s32.totalorder %v369, 0
      %vm376 = vcmp.gt.s32.totalorder %v370, 0
      %v377 = vsel %vm375, %v342, 0.0
      %v378 = vsel %vm376, %v343, 0.0
      %381 = vrot.lane.b32.xlu0 %v373, 17
      %v382 = vpop.permute.xlu0 %381
      %383 = vrot.lane.b32.xlu0 %v374, 17
      %v384 = vpop.permute.xlu0 %383
      %vm385 = vcmask 138240
      %v386 = vsel %vm385, %v382, %v384
      %vm390 = vcmask 1043592
      %391 = vst.msk [vmem:[#allocation2] sm:$0xf] %vm390, %v382
      %392 = vst [vmem:[#allocation2 + $0x8] sm:$0xf] %v386
      %vm393 = vcmask 134144
      %394 = vst.msk [vmem:[#allocation2 + $0x10] sm:$0xf] %vm393, %v384
      %v397 = vrot.slane %v342, 4
      %v398 = vrot.slane %v343, 4
      %399 = vrot.lane.b32.xlu0 %v397, 16
      %v400 = vpop.permute.xlu0 %399
      %401 = vrot.lane.b32.xlu0 %v398, 16
      %v402 = vpop.permute.xlu0 %401
      %vm403 = vcmask 130048
      %v404 = vsel %vm403, %v400, %v402
      %vm408 = vcmask 1047684
      %409 = vst.msk [vmem:[#allocation2] sm:$0xf0] %vm408, %v400
      %410 = vst [vmem:[#allocation2 + $0x8] sm:$0xf0] %v404
      %vm411 = vcmask 130052
      %412 = vst.msk [vmem:[#allocation2 + $0x10] sm:$0xf0] %vm411, %v402
      %415 = vrot.lane.b32.xlu0 %v377, 15
      %v416 = vpop.permute.xlu0 %415
      %417 = vrot.lane.b32.xlu0 %v378, 15
      %v418 = vpop.permute.xlu0 %417
      %vm419 = vcmask 121856
      %v420 = vsel %vm419, %v416, %v418
      %vm424 = vcmask 1043576
      %425 = vst.msk [vmem:[#allocation2 + $0x18] sm:$0xf] %vm424, %v416
      %426 = vst [vmem:[#allocation2 + $0x20] sm:$0xf] %v420
      %vm427 = vcmask 117760
      %428 = vst.msk [vmem:[#allocation2 + $0x28] sm:$0xf] %vm427, %v418
      %429 = vst.msk [vmem:[#allocation2] sm:$0xf] %vm393, 0.0
      %430 = vst.msk [vmem:[#allocation2] sm:$0xf0] %vm411, 0.0
      %vm431 = vcmask 125952
      %432 = vst.msk [vmem:[#allocation2 + $0x18] sm:$0xf] %vm431, 0.0
      %vm433 = vcmask 261248
      %434 = vst.msk [vmem:[#allocation2 + $0x10] sm:$0xff] %vm433, 0.0
      %vm435 = vcmask 257144
      %436 = vst.msk [vmem:[#allocation2 + $0x28] sm:$0xf] %vm435, 0.0
      %v437 = vld [vmem:[%s3] sm:$0xf]
      %v438 = vld [vmem:[#allocation2] sm:$0xff]
      %v439 = vld [vmem:[#allocation2 + $0x8] sm:$0xff]
      %v440 = vld [vmem:[#allocation2 + $0x18] sm:$0xf]
      %v441 = vld [vmem:[#allocation2 + $0x20] sm:$0xf]
      %s442 = scalar_lea.vmem %s3, 4
      %v443 = vld [vmem:[%s442] sm:$0xf]
      %v444 = vld [vmem:[#allocation2 + $0x10] sm:$0xff]
      %v445 = vld [vmem:[#allocation2 + $0x28] sm:$0xf]
      %452 = vrot.lane.b32.xlu0 %v438, 112
      %v453 = vpop.permute.xlu0 %452
      %454 = vrot.lane.b32.xlu0 %v439, 112
      %v455 = vpop.permute.xlu0 %454
      %456 = vrot.lane.b32.xlu0 %v444, 112
      %v457 = vpop.permute.xlu0 %456
      %458 = vrot.lane.b32.xlu0 %v440, 112
      %v459 = vpop.permute.xlu0 %458
      %460 = vrot.lane.b32.xlu0 %v441, 112
      %v461 = vpop.permute.xlu0 %460
      %462 = vrot.lane.b32.xlu0 %v445, 112
      %v463 = vpop.permute.xlu0 %462
      %vm464 = vcmask 916480
      %v465 = vsel %vm464, %v453, %v455
      %v466 = vsel %vm464, %v455, %v457
      %v467 = vsel %vm464, %v459, %v461
      %v468 = vsel %vm464, %v461, %v463
      %vm471 = vcmask 97280
      %v473 = vsel %vm471, %v443, 0
      %v475 = vsel %vm250, %v467, 0
      %v477 = vsel %vm250, %v468, 0
      %479 = vmatprep.subr.mxu0 %v466
      %480 = vmatpush1.msra.mxu0 %v465
      %481 = vmatprep.subr.mxu0 %v477
      %482 = vmatpush1.msra.mxu0 %v475
      %483 = vmatprep.subr.mxu0 0.0
      %484 = vmatpush1.msra.mxu0 0.0
      %485 = vmatprep.subr.mxu0 0.0
      %486 = vmatpush1.msra.mxu0 0.0
      %487 = vmatprep.subr.mxu0 0.0
      %488 = vmatpush1.msra.mxu0 0.0
      %489 = vmatprep.subr.mxu0 0.0
      %490 = vmatpush1.msra.mxu0 0.0
      %491 = vmatprep.subr.mxu0 0.0
      %492 = vmatpush1.msra.mxu0 0.0
      %493 = vmatprep.subr.mxu0 0.0
      %494 = vmatpush1.msra.mxu0 0.0
      %495 = vmatprep.subr.mxu0 0.0
      %496 = vmatpush1.msra.mxu0 0.0
      %497 = vmatprep.subr.mxu0 0.0
      %498 = vmatpush1.msra.mxu0 0.0
      %499 = vmatprep.subr.mxu0 0.0
      %500 = vmatpush1.msra.mxu0 0.0
      %501 = vmatprep.subr.mxu0 0.0
      %502 = vmatpush1.msra.mxu0 0.0
      %503 = vmatprep.subr.mxu0 0.0
      %504 = vmatpush1.msra.mxu0 0.0
      %505 = vmatprep.subr.mxu0 0.0
      %506 = vmatpush1.msra.mxu0 0.0
      %507 = vmatprep.subr.mxu0 0.0
      %508 = vmatpush1.msra.mxu0 0.0
      %509 = vmatprep.subr.mxu0 0.0
      %510 = vmatpush1.msra.mxu0 0.0
      %511 = vmatprep.subr.mxu0 0.0
      %512 = vmatpush1.msra.mxu0 0.0
      %513 = vmatprep.subr.mxu0 0.0
      %514 = vmatpush1.msra.mxu0 0.0
      %515 = vmatprep.subr.mxu0 0.0
      %516 = vmatpush1.msra.mxu0 0.0
      %517 = vmatprep.subr.mxu0 0.0
      %518 = vmatpush1.msra.mxu0 0.0
      %519 = vmatprep.subr.mxu0 0.0
      %520 = vmatpush1.msra.mxu0 0.0
      %521 = vmatprep.subr.mxu0 0.0
      %522 = vmatpush1.msra.mxu0 0.0
      %523 = vmatprep.subr.mxu0 0.0
      %524 = vmatpush1.msra.mxu0 0.0
      %525 = vmatprep.subr.mxu0 0.0
      %526 = vmatpush1.msra.mxu0 0.0
      %527 = vmatprep.subr.mxu0 0.0
      %528 = vmatpush1.msra.mxu0 0.0
      %529 = vmatprep.subr.mxu0 0.0
      %530 = vmatpush1.msra.mxu0 0.0
      %531 = vmatprep.subr.mxu0 0.0
      %532 = vmatpush1.msra.mxu0 0.0
      %533 = vmatprep.subr.mxu0 0.0
      %534 = vmatpush1.msra.mxu0 0.0
      %535 = vmatprep.subr.mxu0 0.0
      %536 = vmatpush1.msra.mxu0 0.0
      %537 = vmatprep.subr.mxu0 0.0
      %538 = vmatpush1.msra.mxu0 0.0
      %539 = vmatprep.subr.mxu0 0.0
      %540 = vmatpush1.msra.mxu0 0.0
      %541 = vmatprep.subr.mxu0 0.0
      %542 = vmatpush1.msra.mxu0 0.0
      %543 = vmatprep.mubr.f32.mxu0 0.0
      %544 = vmatmul.mubr.f32.gmra.mrb[0].mxu0 %v473
      %v545 = vpop.f32.mrb[0].mxu0
      %v546 = vadd.f32 0.0, %v545
      %v547 = vpop.f32.mrb[0].mxu0
      %v548 = vadd.f32 0.0, %v547
      %549 = vdwg.mxu0
      %v551 = vsel %vm471, %v437, 0
      %v553 = vsel %vm250, %v440, 0
      %v555 = vsel %vm250, %v441, 0
      %557 = vmatprep.subr.mxu0 %v439
      %558 = vmatpush1.msra.mxu0 %v438
      %559 = vmatprep.subr.mxu0 %v555
      %560 = vmatpush1.msra.mxu0 %v553
      %561 = vmatprep.subr.mxu0 0.0
      %562 = vmatpush1.msra.mxu0 0.0
      %563 = vmatprep.subr.mxu0 0.0
      %564 = vmatpush1.msra.mxu0 0.0
      %565 = vmatprep.subr.mxu0 0.0
      %566 = vmatpush1.msra.mxu0 0.0
      %567 = vmatprep.subr.mxu0 0.0
      %568 = vmatpush1.msra.mxu0 0.0
      %569 = vmatprep.subr.mxu0 0.0
      %570 = vmatpush1.msra.mxu0 0.0
      %571 = vmatprep.subr.mxu0 0.0
      %572 = vmatpush1.msra.mxu0 0.0
      %573 = vmatprep.subr.mxu0 0.0
      %574 = vmatpush1.msra.mxu0 0.0
      %575 = vmatprep.subr.mxu0 0.0
      %576 = vmatpush1.msra.mxu0 0.0
      %577 = vmatprep.subr.mxu0 0.0
      %578 = vmatpush1.msra.mxu0 0.0
      %579 = vmatprep.subr.mxu0 0.0
      %580 = vmatpush1.msra.mxu0 0.0
      %581 = vmatprep.subr.mxu0 0.0
      %582 = vmatpush1.msra.mxu0 0.0
      %583 = vmatprep.subr.mxu0 0.0
      %584 = vmatpush1.msra.mxu0 0.0
      %585 = vmatprep.subr.mxu0 0.0
      %586 = vmatpush1.msra.mxu0 0.0
      %587 = vmatprep.subr.mxu0 0.0
      %588 = vmatpush1.msra.mxu0 0.0
      %589 = vmatprep.subr.mxu0 0.0
      %590 = vmatpush1.msra.mxu0 0.0
      %591 = vmatprep.subr.mxu0 0.0
      %592 = vmatpush1.msra.mxu0 0.0
      %593 = vmatprep.subr.mxu0 0.0
      %594 = vmatpush1.msra.mxu0 0.0
      %595 = vmatprep.subr.mxu0 0.0
      %596 = vmatpush1.msra.mxu0 0.0
      %597 = vmatprep.subr.mxu0 0.0
      %598 = vmatpush1.msra.mxu0 0.0
      %599 = vmatprep.subr.mxu0 0.0
      %600 = vmatpush1.msra.mxu0 0.0
      %601 = vmatprep.subr.mxu0 0.0
      %602 = vmatpush1.msra.mxu0 0.0
      %603 = vmatprep.subr.mxu0 0.0
      %604 = vmatpush1.msra.mxu0 0.0
      %605 = vmatprep.subr.mxu0 0.0
      %606 = vmatpush1.msra.mxu0 0.0
      %607 = vmatprep.subr.mxu0 0.0
      %608 = vmatpush1.msra.mxu0 0.0
      %609 = vmatprep.subr.mxu0 0.0
      %610 = vmatpush1.msra.mxu0 0.0
      %611 = vmatprep.subr.mxu0 0.0
      %612 = vmatpush1.msra.mxu0 0.0
      %613 = vmatprep.subr.mxu0 0.0
      %614 = vmatpush1.msra.mxu0 0.0
      %615 = vmatprep.subr.mxu0 0.0
      %616 = vmatpush1.msra.mxu0 0.0
      %617 = vmatprep.subr.mxu0 0.0
      %618 = vmatpush1.msra.mxu0 0.0
      %619 = vmatprep.subr.mxu0 0.0
      %620 = vmatpush1.msra.mxu0 0.0
      %621 = vmatprep.mubr.f32.mxu0 0.0
      %622 = vmatmul.mubr.f32.gmra.mrb[0].mxu0 %v551
      %v623 = vpop.f32.mrb[0].mxu0
      %v624 = vadd.f32 %v546, %v623
      %v625 = vpop.f32.mrb[0].mxu0
      %v626 = vadd.f32 %v548, %v625
      %627 = vdwg.mxu0
      %s628 = scalar_lea.vmem %s3, 8
      %v629 = vld [vmem:[%s628] sm:$0xf]
      %630 = vrot.lane.b32.xlu0 %v438, 96
      %v631 = vpop.permute.xlu0 %630
      %632 = vrot.lane.b32.xlu0 %v439, 96
      %v633 = vpop.permute.xlu0 %632
      %634 = vrot.lane.b32.xlu0 %v444, 96
      %v635 = vpop.permute.xlu0 %634
      %636 = vrot.lane.b32.xlu0 %v440, 96
      %v637 = vpop.permute.xlu0 %636
      %638 = vrot.lane.b32.xlu0 %v441, 96
      %v639 = vpop.permute.xlu0 %638
      %640 = vrot.lane.b32.xlu0 %v445, 96
      %v641 = vpop.permute.xlu0 %640
      %vm642 = vcmask 785408
      %v643 = vsel %vm642, %v631, %v633
      %v644 = vsel %vm642, %v633, %v635
      %v645 = vsel %vm642, %v637, %v639
      %v646 = vsel %vm642, %v639, %v641
      %v650 = vsel %vm471, %v629, 0
      %v652 = vsel %vm250, %v645, 0
      %v654 = vsel %vm250, %v646, 0
      %656 = vmatprep.subr.mxu0 %v644
      %657 = vmatpush1.msra.mxu0 %v643
      %658 = vmatprep.subr.mxu0 %v654
      %659 = vmatpush1.msra.mxu0 %v652
      %660 = vmatprep.subr.mxu0 0.0
      %661 = vmatpush1.msra.mxu0 0.0
      %662 = vmatprep.subr.mxu0 0.0
      %663 = vmatpush1.msra.mxu0 0.0
      %664 = vmatprep.subr.mxu0 0.0
      %665 = vmatpush1.msra.mxu0 0.0
      %666 = vmatprep.subr.mxu0 0.0
      %667 = vmatpush1.msra.mxu0 0.0
      %668 = vmatprep.subr.mxu0 0.0
      %669 = vmatpush1.msra.mxu0 0.0
      %670 = vmatprep.subr.mxu0 0.0
      %671 = vmatpush1.msra.mxu0 0.0
      %672 = vmatprep.subr.mxu0 0.0
      %673 = vmatpush1.msra.mxu0 0.0
      %674 = vmatprep.subr.mxu0 0.0
      %675 = vmatpush1.msra.mxu0 0.0
      %676 = vmatprep.subr.mxu0 0.0
      %677 = vmatpush1.msra.mxu0 0.0
      %678 = vmatprep.subr.mxu0 0.0
      %679 = vmatpush1.msra.mxu0 0.0
      %680 = vmatprep.subr.mxu0 0.0
      %681 = vmatpush1.msra.mxu0 0.0
      %682 = vmatprep.subr.mxu0 0.0
      %683 = vmatpush1.msra.mxu0 0.0
      %684 = vmatprep.subr.mxu0 0.0
      %685 = vmatpush1.msra.mxu0 0.0
      %686 = vmatprep.subr.mxu0 0.0
      %687 = vmatpush1.msra.mxu0 0.0
      %688 = vmatprep.subr.mxu0 0.0
      %689 = vmatpush1.msra.mxu0 0.0
      %690 = vmatprep.subr.mxu0 0.0
      %691 = vmatpush1.msra.mxu0 0.0
      %692 = vmatprep.subr.mxu0 0.0
      %693 = vmatpush1.msra.mxu0 0.0
      %694 = vmatprep.subr.mxu0 0.0
      %695 = vmatpush1.msra.mxu0 0.0
      %696 = vmatprep.subr.mxu0 0.0
      %697 = vmatpush1.msra.mxu0 0.0
      %698 = vmatprep.subr.mxu0 0.0
      %699 = vmatpush1.msra.mxu0 0.0
      %700 = vmatprep.subr.mxu0 0.0
      %701 = vmatpush1.msra.mxu0 0.0
      %702 = vmatprep.subr.mxu0 0.0
      %703 = vmatpush1.msra.mxu0 0.0
      %704 = vmatprep.subr.mxu0 0.0
      %705 = vmatpush1.msra.mxu0 0.0
      %706 = vmatprep.subr.mxu0 0.0
      %707 = vmatpush1.msra.mxu0 0.0
      %708 = vmatprep.subr.mxu0 0.0
      %709 = vmatpush1.msra.mxu0 0.0
      %710 = vmatprep.subr.mxu0 0.0
      %711 = vmatpush1.msra.mxu0 0.0
      %712 = vmatprep.subr.mxu0 0.0
      %713 = vmatpush1.msra.mxu0 0.0
      %714 = vmatprep.subr.mxu0 0.0
      %715 = vmatpush1.msra.mxu0 0.0
      %716 = vmatprep.subr.mxu0 0.0
      %717 = vmatpush1.msra.mxu0 0.0
      %718 = vmatprep.subr.mxu0 0.0
      %719 = vmatpush1.msra.mxu0 0.0
      %720 = vmatprep.mubr.f32.mxu0 0.0
      %721 = vmatmul.mubr.f32.gmra.mrb[0].mxu0 %v650
      %v722 = vpop.f32.mrb[0].mxu0
      %v723 = vadd.f32 0.0, %v722
      %v724 = vpop.f32.mrb[0].mxu0
      %v725 = vadd.f32 0.0, %v724
      %726 = vdwg.mxu0
      %v727 = vadd.f32 %v624, %v723
      %v728 = vadd.f32 %v626, %v725
      %v731 = vcombine.low %v727, %v728
      %733 = vst [vmem:[%s231] sm:$0xff] %v731
      %v734 = vsel %vm250, %v727, 0.0
      %v735 = vsel %vm250, %v728, 0.0
      %v736 = vadd.f32 %v734, %v735
      %737 = vadd.xlane.f32.xlu0 %v736
      %v738 = vpop.xlane.xlu0 %737
      %vm739 = vcmask 3072
      %740 = vst.msk [vmem:[%s235] sm:$0xf] %vm739, %v738
      %v741 = vmul.f32 %v727, %v727
      %v742 = vmul.f32 %v728, %v728
      %v743 = vsel %vm250, %v741, 0.0
      %v744 = vsel %vm250, %v742, 0.0
      %v745 = vadd.f32 %v743, %v744
      %746 = vadd.xlane.f32.xlu0 %v745
      %v747 = vpop.xlane.xlu0 %746
      %748 = vst.msk [vmem:[%s235 + $0x4] sm:$0xf] %vm739, %v747
      %p749 = scmp.lt.s32.totalorder %s17, 1
      %s750 = scalar_select %p749, %s17, 1
      %s751 = smul.addr %s750, 2
      %s752 = smul.addr %s751, 4
      %s753 = scalar_lea.vmem %s4, %s752
      %p754 = scmp.lt.s32.totalorder %s17, 1
      %s755 = scalar_select %p754, %s17, 1
      %s756 = smul.addr %s755, 8
      %s757 = scalar_lea.vmem %s5, %s756
      // Predicated region
      $region37: #{resblock_pallas.4} parent=35 // pred_check
        %p758 = pneg %p124
      $region38: #{resblock_pallas.4} parent=35 // pred_check_branch
        %760 = sbr.rel (%p758) target = $region40
      $region39: #{resblock_pallas.4} parent=35 // pred_region
        _
      $region40: #{resblock_pallas.4} parent=35 // pred_fallthru
        _
      // Predicated region
      $region41: #{resblock_pallas.4} parent=35 // pred_check
        %p761 = pneg %p150
      $region42: #{resblock_pallas.4} parent=35 // pred_check_branch
        %763 = sbr.rel (%p761) target = $region44
      $region43: #{resblock_pallas.4} parent=35 // pred_region
        _
      $region44: #{resblock_pallas.4} parent=35 // pred_fallthru
        _
    $region36: #{resblock_pallas.4} parent=5 // pred_fallthru
      _
    %p764 = scmp.le.s32.totalorder 2, %s12
    // Predicated region
    $region45: #{resblock_pallas.4} parent=5 // pred_check
      %p765 = pneg %p764
    $region46: #{resblock_pallas.4} parent=5 // pred_check_branch
      %767 = sbr.rel (%p765) target = $region48
    $region47: #{resblock_pallas.4} parent=5 // pred_region
      %s768 = ssub.s32 %s12, 2
      // Predicated region
      $region49: #{resblock_pallas.4} parent=47 // pred_check
        %p769 = pneg %p130
      $region50: #{resblock_pallas.4} parent=47 // pred_check_branch
        %771 = sbr.rel (%p769) target = $region52
      $region51: #{resblock_pallas.4} parent=47 // pred_region
        %p772 = scmp.lt.s32.totalorder %s18, 1
        %s773 = scalar_select %p772, %s18, 1
        %s774 = smul.addr %s773, 2
        %s775 = smul.addr %s774, 4
        %s776 = scalar_lea.vmem %s4, %s775
      $region52: #{resblock_pallas.4} parent=47 // pred_fallthru
        _
      // Predicated region
      $region53: #{resblock_pallas.4} parent=47 // pred_check
        %p777 = pneg %p156
      $region54: #{resblock_pallas.4} parent=47 // pred_check_branch
        %779 = sbr.rel (%p777) target = $region56
      $region55: #{resblock_pallas.4} parent=47 // pred_region
        %p780 = scmp.lt.s32.totalorder %s18, 1
        %s781 = scalar_select %p780, %s18, 1
        %s782 = smul.addr %s781, 8
        %s783 = scalar_lea.vmem %s5, %s782
      $region56: #{resblock_pallas.4} parent=47 // pred_fallthru
        _
    $region48: #{resblock_pallas.4} parent=5 // pred_fallthru
      _
  $region6: #{resblock_pallas.4} parent=0 // loop_footer
    %s16 = sadd.s32 1, %s12
  $region7: #{resblock_pallas.4} parent=0 // loop_footer_branch
    %11 = sbr.rel target = $region3
  $region8: #{resblock_pallas.4} parent=0 // loop_exit
    _

</llo_original>
